<compile_context>
chip_gen: v7x
topology: tpu7x:2x2x1
jax: 0.10.0
libtpu: 0.0.40
codegen_flags: <defaults>
</compile_context>

<pallas_src>
import jax
import jax.numpy as jnp
from jax.experimental import pallas as pl
from jax.experimental.pallas import tpu as pltpu


def _round_up(n: int, m: int) -> int:
    return ((n + m - 1) // m) * m


def _mlp_kernel(x_ref,
                w1_ref, b1_ref,
                w2_ref, b2_ref,
                w3_ref, b3_ref,
                w4_ref, b4_ref,
                w5_ref, b5_ref,
                wo_ref, bo_ref,
                o_ref):
    """Entire MLP forward for one batch tile, fused in VMEM.

    Activations/weights are bf16 at the MXU inputs; accumulation, bias add, ReLU
    and the sigmoid head run in f32.
    """

    def linear_relu(h, w_ref, b_ref):
        y = jnp.dot(h, w_ref[...], preferred_element_type=jnp.float32)
        y = jnp.maximum(y + b_ref[...], 0.0)
        return y.astype(jnp.bfloat16)          # next layer's MXU input

    h = x_ref[...]                              # bf16 (batch_tile, input_size)
    h = linear_relu(h, w1_ref, b1_ref)
    h = linear_relu(h, w2_ref, b2_ref)
    h = linear_relu(h, w3_ref, b3_ref)
    h = linear_relu(h, w4_ref, b4_ref)
    # fc5 applied three times with the same weights, matching the PyTorch forward.
    # (On v5e at tiny batch one could stage w5 once via pltpu.matmul_push_rhs; at
    #  batch_tile=256 the compute dominates, so regular jnp.dot is used.)
    h = linear_relu(h, w5_ref, b5_ref)
    h = linear_relu(h, w5_ref, b5_ref)
    h = linear_relu(h, w5_ref, b5_ref)
    # Output head: sigmoid(fc_out(h)). exp and the approximate reciprocal both run
    # on the EUP, keeping the epilogue off the VALU.
    z = jnp.dot(h, wo_ref[...], preferred_element_type=jnp.float32) + bo_ref[...]
    o_ref[...] = pl.reciprocal(1.0 + jnp.exp(-z), approx=True)


def deep_mlp_forward(x, params, *, batch_tile=256):
    """x: (B, input_size) float array. params: f32 dict of (in,out) weights and (1,out) biases.

    Returns (B, output_size) float32 = sigmoid(fc_out(relu(...))) matching DeepMLPNet.forward.
    """
    B, in_size = x.shape
    out_size = params["wo"].shape[1]

    # bf16 sublane packing -> rows per tile must be a multiple of 16; cap the tile so
    # tiny batches are not padded all the way up to 256 rows.
    batch_tile = _round_up(batch_tile, 16)
    batch_tile = min(batch_tile, _round_up(B, 16))
    num_tiles = pl.cdiv(B, batch_tile)
    b_pad = num_tiles * batch_tile

    # Lane-dense output slab: pad the narrow head to a multiple of 128 so the kernel
    # store is an unmasked vst; sliced back to out_size below.
    out_pad = _round_up(out_size, 128)

    x_bf = x.astype(jnp.bfloat16)
    if b_pad != B:
        x_bf = jnp.pad(x_bf, ((0, b_pad - B), (0, 0)))

    wo = jnp.pad(params["wo"], ((0, 0), (0, out_pad - out_size))).astype(jnp.bfloat16)
    bo = jnp.pad(params["bo"], ((0, 0), (0, out_pad - out_size))).astype(jnp.float32)

    args = [x_bf]
    for n in ("1", "2", "3", "4", "5"):
        args.append(params[f"w{n}"].astype(jnp.bfloat16))   # bf16 MXU weights
        args.append(params[f"b{n}"].astype(jnp.float32))    # f32 biases
    args += [wo, bo]

    def resident(arr):
        # Whole parameter resident in VMEM; the constant block index means it is not
        # re-fetched across batch tiles.
        return pl.BlockSpec(arr.shape, lambda i: (0, 0))

    in_specs = [pl.BlockSpec((batch_tile, in_size), lambda i: (i, 0))]
    in_specs += [resident(a) for a in args[1:]]
    out_specs = pl.BlockSpec((batch_tile, out_pad), lambda i: (i, 0))

    out = pl.pallas_call(
        _mlp_kernel,
        grid=(num_tiles,),
        in_specs=in_specs,
        out_specs=out_specs,
        out_shape=jax.ShapeDtypeStruct((b_pad, out_pad), jnp.float32),
        compiler_params=pltpu.CompilerParams(
            # Batch tiles are independent -> megacore shards them across the two
            # TensorCores of a v7x chip whenever num_tiles >= 2.
            dimension_semantics=("parallel",)),
    )(*args)

    return out[:B, :out_size]


def init_params(key, input_size, hidden_size, output_size):
    """Deterministic init mimicking nn.Linear default (uniform +/-1/sqrt(fan_in)).
    Weights stored transposed to (in_features, out_features); biases as (1, out)."""
    params = {}
    layer_dims = [
        ("1", input_size, hidden_size),
        ("2", hidden_size, hidden_size),
        ("3", hidden_size, hidden_size),
        ("4", hidden_size, hidden_size),
        ("5", hidden_size, hidden_size),
        ("o", hidden_size, output_size),
    ]
    for name, fan_in, fan_out in layer_dims:
        key, kw, kb = jax.random.split(key, 3)
        bound = 1.0 / jnp.sqrt(jnp.float32(fan_in))
        params[f"w{name}"] = jax.random.uniform(
            kw, (fan_in, fan_out), jnp.float32, -bound, bound)
        params[f"b{name}"] = jax.random.uniform(
            kb, (1, fan_out), jnp.float32, -bound, bound)
    return params


def reference_forward(x, params):
    """Pure-JAX reference using the same bf16-in / f32-accumulate matmul recipe."""
    bf16 = jnp.bfloat16

    def lr(h, w, b):
        y = jnp.dot(h.astype(bf16), w.astype(bf16),
                    preferred_element_type=jnp.float32) + b
        return jnp.maximum(y, 0.0)

    h = lr(x, params["w1"], params["b1"])
    h = lr(h, params["w2"], params["b2"])
    h = lr(h, params["w3"], params["b3"])
    h = lr(h, params["w4"], params["b4"])
    h = lr(h, params["w5"], params["b5"])
    h = lr(h, params["w5"], params["b5"])
    h = lr(h, params["w5"], params["b5"])
    z = jnp.dot(h.astype(bf16), params["wo"].astype(bf16),
                preferred_element_type=jnp.float32) + params["bo"]
    return jax.nn.sigmoid(z)


if __name__ == "__main__":
    # Shapes consistent with the module: input=32, hidden=128, output=6.
    # batch=512 -> two 256-row tiles: each tile fills the MXU rows and the 2-step
    # parallel grid lets v7x megacore use both TensorCores.
    input_size, hidden_size, output_size = 32, 128, 6
    batch = 512

    key = jax.random.PRNGKey(0)
    key, kx = jax.random.split(key)
    x = jax.random.normal(kx, (batch, input_size), jnp.float32)
    params = init_params(key, input_size, hidden_size, output_size)

    out = deep_mlp_forward(x, params)
    out = jax.block_until_ready(out)
    assert out.shape == (batch, output_size)

    ref = reference_forward(x, params)
    # bf16 matmul inputs + approximate-reciprocal sigmoid -> relaxed tolerance.
    assert jnp.allclose(out, ref, atol=1e-2, rtol=1e-2), "mismatch vs JAX reference"

    print("KERNEL_OK")
</pallas_src>

<mosaic_0001>
module attributes {stable_mosaic.version = 11 : i64} {
  func.func @_mlp_kernel(%arg0: i32, %arg1: memref<256x32xbf16, #tpu.memory_space<vmem>>, %arg2: memref<32x128xbf16, #tpu.memory_space<vmem>>, %arg3: memref<1x128xf32, #tpu.memory_space<vmem>>, %arg4: memref<128x128xbf16, #tpu.memory_space<vmem>>, %arg5: memref<1x128xf32, #tpu.memory_space<vmem>>, %arg6: memref<128x128xbf16, #tpu.memory_space<vmem>>, %arg7: memref<1x128xf32, #tpu.memory_space<vmem>>, %arg8: memref<128x128xbf16, #tpu.memory_space<vmem>>, %arg9: memref<1x128xf32, #tpu.memory_space<vmem>>, %arg10: memref<128x128xbf16, #tpu.memory_space<vmem>>, %arg11: memref<1x128xf32, #tpu.memory_space<vmem>>, %arg12: memref<128x128xbf16, #tpu.memory_space<vmem>>, %arg13: memref<1x128xf32, #tpu.memory_space<vmem>>, %arg14: memref<256x128xf32, #tpu.memory_space<vmem>>) attributes {dimension_semantics = [#tpu.dimension_semantics<parallel>], iteration_bounds = array<i64: 2>, scalar_prefetch = 0 : i64, scratch_operands = 0 : i64, tpu.core_type = #tpu.core_type<tc>, window_params = [{transform_indices = @transform_0, window_bounds = array<i64: 256, 32>}, {pipeline_mode = #tpu.pipeline_mode<synchronous>, transform_indices = @transform_1, window_bounds = array<i64: 32, 128>}, {pipeline_mode = #tpu.pipeline_mode<synchronous>, transform_indices = @transform_2, window_bounds = array<i64: 1, 128>}, {pipeline_mode = #tpu.pipeline_mode<synchronous>, transform_indices = @transform_3, window_bounds = array<i64: 128, 128>}, {pipeline_mode = #tpu.pipeline_mode<synchronous>, transform_indices = @transform_4, window_bounds = array<i64: 1, 128>}, {pipeline_mode = #tpu.pipeline_mode<synchronous>, transform_indices = @transform_5, window_bounds = array<i64: 128, 128>}, {pipeline_mode = #tpu.pipeline_mode<synchronous>, transform_indices = @transform_6, window_bounds = array<i64: 1, 128>}, {pipeline_mode = #tpu.pipeline_mode<synchronous>, transform_indices = @transform_7, window_bounds = array<i64: 128, 128>}, {pipeline_mode = #tpu.pipeline_mode<synchronous>, transform_indices = @transform_8, window_bounds = array<i64: 1, 128>}, {pipeline_mode = #tpu.pipeline_mode<synchronous>, transform_indices = @transform_9, window_bounds = array<i64: 128, 128>}, {pipeline_mode = #tpu.pipeline_mode<synchronous>, transform_indices = @transform_10, window_bounds = array<i64: 1, 128>}, {pipeline_mode = #tpu.pipeline_mode<synchronous>, transform_indices = @transform_11, window_bounds = array<i64: 128, 128>}, {pipeline_mode = #tpu.pipeline_mode<synchronous>, transform_indices = @transform_12, window_bounds = array<i64: 1, 128>}, {transform_indices = @transform_13, window_bounds = array<i64: 256, 128>}]} {
    %c0 = arith.constant 0 : index
    %c0_0 = arith.constant 0 : index
    %0 = vector.load %arg1[%c0, %c0_0] : memref<256x32xbf16, #tpu.memory_space<vmem>>, vector<256x32xbf16>
    %c0_1 = arith.constant 0 : index
    %c0_2 = arith.constant 0 : index
    %1 = vector.load %arg2[%c0_1, %c0_2] : memref<32x128xbf16, #tpu.memory_space<vmem>>, vector<32x128xbf16>
    %cst = arith.constant dense<0.000000e+00> : vector<256x128xf32>
    %2 = tpu.matmul %0, %1, %cst {dimension_numbers = #tpu.dot_dimension_numbers<[1], [0], [0], [1], [0, 0, 1, 1], [], []>} : vector<256x32xbf16>, vector<32x128xbf16>, vector<256x128xf32> -> vector<256x128xf32>
    %c0_3 = arith.constant 0 : index
    %c0_4 = arith.constant 0 : index
    %3 = vector.load %arg3[%c0_3, %c0_4] : memref<1x128xf32, #tpu.memory_space<vmem>>, vector<1x128xf32>
    %4 = vector.broadcast %3 : vector<1x128xf32> to vector<256x128xf32>
    %5 = arith.addf %2, %4 : vector<256x128xf32>
    %cst_5 = arith.constant 0.000000e+00 : f32
    %6 = vector.broadcast %cst_5 : f32 to vector<256x128xf32>
    %7 = arith.maximumf %5, %6 : vector<256x128xf32>
    %8 = arith.truncf %7 : vector<256x128xf32> to vector<256x128xbf16>
    %c0_6 = arith.constant 0 : index
    %c0_7 = arith.constant 0 : index
    %9 = vector.load %arg4[%c0_6, %c0_7] : memref<128x128xbf16, #tpu.memory_space<vmem>>, vector<128x128xbf16>
    %cst_8 = arith.constant dense<0.000000e+00> : vector<256x128xf32>
    %10 = tpu.matmul %8, %9, %cst_8 {dimension_numbers = #tpu.dot_dimension_numbers<[1], [0], [0], [1], [0, 0, 1, 1], [], []>} : vector<256x128xbf16>, vector<128x128xbf16>, vector<256x128xf32> -> vector<256x128xf32>
    %c0_9 = arith.constant 0 : index
    %c0_10 = arith.constant 0 : index
    %11 = vector.load %arg5[%c0_9, %c0_10] : memref<1x128xf32, #tpu.memory_space<vmem>>, vector<1x128xf32>
    %12 = vector.broadcast %11 : vector<1x128xf32> to vector<256x128xf32>
    %13 = arith.addf %10, %12 : vector<256x128xf32>
    %cst_11 = arith.constant 0.000000e+00 : f32
    %14 = vector.broadcast %cst_11 : f32 to vector<256x128xf32>
    %15 = arith.maximumf %13, %14 : vector<256x128xf32>
    %16 = arith.truncf %15 : vector<256x128xf32> to vector<256x128xbf16>
    %c0_12 = arith.constant 0 : index
    %c0_13 = arith.constant 0 : index
    %17 = vector.load %arg6[%c0_12, %c0_13] : memref<128x128xbf16, #tpu.memory_space<vmem>>, vector<128x128xbf16>
    %cst_14 = arith.constant dense<0.000000e+00> : vector<256x128xf32>
    %18 = tpu.matmul %16, %17, %cst_14 {dimension_numbers = #tpu.dot_dimension_numbers<[1], [0], [0], [1], [0, 0, 1, 1], [], []>} : vector<256x128xbf16>, vector<128x128xbf16>, vector<256x128xf32> -> vector<256x128xf32>
    %c0_15 = arith.constant 0 : index
    %c0_16 = arith.constant 0 : index
    %19 = vector.load %arg7[%c0_15, %c0_16] : memref<1x128xf32, #tpu.memory_space<vmem>>, vector<1x128xf32>
    %20 = vector.broadcast %19 : vector<1x128xf32> to vector<256x128xf32>
    %21 = arith.addf %18, %20 : vector<256x128xf32>
    %cst_17 = arith.constant 0.000000e+00 : f32
    %22 = vector.broadcast %cst_17 : f32 to vector<256x128xf32>
    %23 = arith.maximumf %21, %22 : vector<256x128xf32>
    %24 = arith.truncf %23 : vector<256x128xf32> to vector<256x128xbf16>
    %c0_18 = arith.constant 0 : index
    %c0_19 = arith.constant 0 : index
    %25 = vector.load %arg8[%c0_18, %c0_19] : memref<128x128xbf16, #tpu.memory_space<vmem>>, vector<128x128xbf16>
    %cst_20 = arith.constant dense<0.000000e+00> : vector<256x128xf32>
    %26 = tpu.matmul %24, %25, %cst_20 {dimension_numbers = #tpu.dot_dimension_numbers<[1], [0], [0], [1], [0, 0, 1, 1], [], []>} : vector<256x128xbf16>, vector<128x128xbf16>, vector<256x128xf32> -> vector<256x128xf32>
    %c0_21 = arith.constant 0 : index
    %c0_22 = arith.constant 0 : index
    %27 = vector.load %arg9[%c0_21, %c0_22] : memref<1x128xf32, #tpu.memory_space<vmem>>, vector<1x128xf32>
    %28 = vector.broadcast %27 : vector<1x128xf32> to vector<256x128xf32>
    %29 = arith.addf %26, %28 : vector<256x128xf32>
    %cst_23 = arith.constant 0.000000e+00 : f32
    %30 = vector.broadcast %cst_23 : f32 to vector<256x128xf32>
    %31 = arith.maximumf %29, %30 : vector<256x128xf32>
    %32 = arith.truncf %31 : vector<256x128xf32> to vector<256x128xbf16>
    %c0_24 = arith.constant 0 : index
    %c0_25 = arith.constant 0 : index
    %33 = vector.load %arg10[%c0_24, %c0_25] : memref<128x128xbf16, #tpu.memory_space<vmem>>, vector<128x128xbf16>
    %cst_26 = arith.constant dense<0.000000e+00> : vector<256x128xf32>
    %34 = tpu.matmul %32, %33, %cst_26 {dimension_numbers = #tpu.dot_dimension_numbers<[1], [0], [0], [1], [0, 0, 1, 1], [], []>} : vector<256x128xbf16>, vector<128x128xbf16>, vector<256x128xf32> -> vector<256x128xf32>
    %c0_27 = arith.constant 0 : index
    %c0_28 = arith.constant 0 : index
    %35 = vector.load %arg11[%c0_27, %c0_28] : memref<1x128xf32, #tpu.memory_space<vmem>>, vector<1x128xf32>
    %36 = vector.broadcast %35 : vector<1x128xf32> to vector<256x128xf32>
    %37 = arith.addf %34, %36 : vector<256x128xf32>
    %cst_29 = arith.constant 0.000000e+00 : f32
    %38 = vector.broadcast %cst_29 : f32 to vector<256x128xf32>
    %39 = arith.maximumf %37, %38 : vector<256x128xf32>
    %40 = arith.truncf %39 : vector<256x128xf32> to vector<256x128xbf16>
    %c0_30 = arith.constant 0 : index
    %c0_31 = arith.constant 0 : index
    %41 = vector.load %arg10[%c0_30, %c0_31] : memref<128x128xbf16, #tpu.memory_space<vmem>>, vector<128x128xbf16>
    %cst_32 = arith.constant dense<0.000000e+00> : vector<256x128xf32>
    %42 = tpu.matmul %40, %41, %cst_32 {dimension_numbers = #tpu.dot_dimension_numbers<[1], [0], [0], [1], [0, 0, 1, 1], [], []>} : vector<256x128xbf16>, vector<128x128xbf16>, vector<256x128xf32> -> vector<256x128xf32>
    %c0_33 = arith.constant 0 : index
    %c0_34 = arith.constant 0 : index
    %43 = vector.load %arg11[%c0_33, %c0_34] : memref<1x128xf32, #tpu.memory_space<vmem>>, vector<1x128xf32>
    %44 = vector.broadcast %43 : vector<1x128xf32> to vector<256x128xf32>
    %45 = arith.addf %42, %44 : vector<256x128xf32>
    %cst_35 = arith.constant 0.000000e+00 : f32
    %46 = vector.broadcast %cst_35 : f32 to vector<256x128xf32>
    %47 = arith.maximumf %45, %46 : vector<256x128xf32>
    %48 = arith.truncf %47 : vector<256x128xf32> to vector<256x128xbf16>
    %c0_36 = arith.constant 0 : index
    %c0_37 = arith.constant 0 : index
    %49 = vector.load %arg10[%c0_36, %c0_37] : memref<128x128xbf16, #tpu.memory_space<vmem>>, vector<128x128xbf16>
    %cst_38 = arith.constant dense<0.000000e+00> : vector<256x128xf32>
    %50 = tpu.matmul %48, %49, %cst_38 {dimension_numbers = #tpu.dot_dimension_numbers<[1], [0], [0], [1], [0, 0, 1, 1], [], []>} : vector<256x128xbf16>, vector<128x128xbf16>, vector<256x128xf32> -> vector<256x128xf32>
    %c0_39 = arith.constant 0 : index
    %c0_40 = arith.constant 0 : index
    %51 = vector.load %arg11[%c0_39, %c0_40] : memref<1x128xf32, #tpu.memory_space<vmem>>, vector<1x128xf32>
    %52 = vector.broadcast %51 : vector<1x128xf32> to vector<256x128xf32>
    %53 = arith.addf %50, %52 : vector<256x128xf32>
    %cst_41 = arith.constant 0.000000e+00 : f32
    %54 = vector.broadcast %cst_41 : f32 to vector<256x128xf32>
    %55 = arith.maximumf %53, %54 : vector<256x128xf32>
    %56 = arith.truncf %55 : vector<256x128xf32> to vector<256x128xbf16>
    %c0_42 = arith.constant 0 : index
    %c0_43 = arith.constant 0 : index
    %57 = vector.load %arg12[%c0_42, %c0_43] : memref<128x128xbf16, #tpu.memory_space<vmem>>, vector<128x128xbf16>
    %cst_44 = arith.constant dense<0.000000e+00> : vector<256x128xf32>
    %58 = tpu.matmul %56, %57, %cst_44 {dimension_numbers = #tpu.dot_dimension_numbers<[1], [0], [0], [1], [0, 0, 1, 1], [], []>} : vector<256x128xbf16>, vector<128x128xbf16>, vector<256x128xf32> -> vector<256x128xf32>
    %c0_45 = arith.constant 0 : index
    %c0_46 = arith.constant 0 : index
    %59 = vector.load %arg13[%c0_45, %c0_46] : memref<1x128xf32, #tpu.memory_space<vmem>>, vector<1x128xf32>
    %60 = vector.broadcast %59 : vector<1x128xf32> to vector<256x128xf32>
    %61 = arith.addf %58, %60 : vector<256x128xf32>
    %cst_47 = arith.constant 0.000000e+00 : f32
    %62 = vector.broadcast %cst_47 : f32 to vector<256x128xf32>
    %63 = arith.subf %62, %61 : vector<256x128xf32>
    %64 = math.exp %63 : vector<256x128xf32>
    %cst_48 = arith.constant 1.000000e+00 : f32
    %65 = vector.broadcast %cst_48 : f32 to vector<256x128xf32>
    %66 = arith.addf %65, %64 : vector<256x128xf32>
    %67 = tpu.reciprocal %66 {approx = true} : vector<256x128xf32> -> vector<256x128xf32>
    %c0_49 = arith.constant 0 : index
    %c0_50 = arith.constant 0 : index
    %68 = vector.load %arg14[%c0_49, %c0_50] : memref<256x128xf32, #tpu.memory_space<vmem>>, vector<256x128xf32>
    tpu.vector_store %arg14[%c0_49, %c0_50], %67 {strides = array<i32>} : memref<256x128xf32, #tpu.memory_space<vmem>>, vector<256x128xf32>,
    return
  }
  func.func @transform_0(%arg0: i32) -> (i32, i32) {
    %c0_i32 = arith.constant 0 : i32
    %c0_i32_0 = arith.constant 0 : i32
    return %arg0, %c0_i32 : i32, i32
  }
  func.func @transform_1(%arg0: i32) -> (i32, i32) {
    %c0_i32 = arith.constant 0 : i32
    %c0_i32_0 = arith.constant 0 : i32
    %c0_i32_1 = arith.constant 0 : i32
    return %c0_i32, %c0_i32_0 : i32, i32
  }
  func.func @transform_2(%arg0: i32) -> (i32, i32) {
    %c0_i32 = arith.constant 0 : i32
    %c0_i32_0 = arith.constant 0 : i32
    %c0_i32_1 = arith.constant 0 : i32
    return %c0_i32, %c0_i32_0 : i32, i32
  }
  func.func @transform_3(%arg0: i32) -> (i32, i32) {
    %c0_i32 = arith.constant 0 : i32
    %c0_i32_0 = arith.constant 0 : i32
    %c0_i32_1 = arith.constant 0 : i32
    return %c0_i32, %c0_i32_0 : i32, i32
  }
  func.func @transform_4(%arg0: i32) -> (i32, i32) {
    %c0_i32 = arith.constant 0 : i32
    %c0_i32_0 = arith.constant 0 : i32
    %c0_i32_1 = arith.constant 0 : i32
    return %c0_i32, %c0_i32_0 : i32, i32
  }
  func.func @transform_5(%arg0: i32) -> (i32, i32) {
    %c0_i32 = arith.constant 0 : i32
    %c0_i32_0 = arith.constant 0 : i32
    %c0_i32_1 = arith.constant 0 : i32
    return %c0_i32, %c0_i32_0 : i32, i32
  }
  func.func @transform_6(%arg0: i32) -> (i32, i32) {
    %c0_i32 = arith.constant 0 : i32
    %c0_i32_0 = arith.constant 0 : i32
    %c0_i32_1 = arith.constant 0 : i32
    return %c0_i32, %c0_i32_0 : i32, i32
  }
  func.func @transform_7(%arg0: i32) -> (i32, i32) {
    %c0_i32 = arith.constant 0 : i32
    %c0_i32_0 = arith.constant 0 : i32
    %c0_i32_1 = arith.constant 0 : i32
    return %c0_i32, %c0_i32_0 : i32, i32
  }
  func.func @transform_8(%arg0: i32) -> (i32, i32) {
    %c0_i32 = arith.constant 0 : i32
    %c0_i32_0 = arith.constant 0 : i32
    %c0_i32_1 = arith.constant 0 : i32
    return %c0_i32, %c0_i32_0 : i32, i32
  }
  func.func @transform_9(%arg0: i32) -> (i32, i32) {
    %c0_i32 = arith.constant 0 : i32
    %c0_i32_0 = arith.constant 0 : i32
    %c0_i32_1 = arith.constant 0 : i32
    return %c0_i32, %c0_i32_0 : i32, i32
  }
  func.func @transform_10(%arg0: i32) -> (i32, i32) {
    %c0_i32 = arith.constant 0 : i32
    %c0_i32_0 = arith.constant 0 : i32
    %c0_i32_1 = arith.constant 0 : i32
    return %c0_i32, %c0_i32_0 : i32, i32
  }
  func.func @transform_11(%arg0: i32) -> (i32, i32) {
    %c0_i32 = arith.constant 0 : i32
    %c0_i32_0 = arith.constant 0 : i32
    %c0_i32_1 = arith.constant 0 : i32
    return %c0_i32, %c0_i32_0 : i32, i32
  }
  func.func @transform_12(%arg0: i32) -> (i32, i32) {
    %c0_i32 = arith.constant 0 : i32
    %c0_i32_0 = arith.constant 0 : i32
    %c0_i32_1 = arith.constant 0 : i32
    return %c0_i32, %c0_i32_0 : i32, i32
  }
  func.func @transform_13(%arg0: i32) -> (i32, i32) {
    %c0_i32 = arith.constant 0 : i32
    %c0_i32_0 = arith.constant 0 : i32
    return %arg0, %c0_i32 : i32, i32
  }
}

</mosaic_0001>

<llo_original>
// kernel: tpu_custom_call.1
$region0: #{tpu_custom_call.1}
  #allocation0 [shape = 'u32[]', space=smem, size = 0x4, offset = 0x4, fixed_abs, tag = 'smem constant byte address 0x4 - core index']
  #allocation1 [shape = 'u32[144,128]{1,0:T(1,128)}', space=vmem, size = 0x12000, scoped, tag = 'internal scratch']
  %s0 = inlined_call_operand.vmem [shape: bf16[512,32], index: 0, kind: input, shape index: {}]
  %s1 = inlined_call_operand.hbm [shape: bf16[32,128], index: 1, kind: input, shape index: {}]
  %s2 = inlined_call_operand.vmem [shape: f32[1,128], index: 2, kind: input, shape index: {}]
  %s3 = inlined_call_operand.vmem [shape: bf16[128,128], index: 3, kind: input, shape index: {}]
  %s4 = inlined_call_operand.vmem [shape: f32[1,128], index: 4, kind: input, shape index: {}]
  %s5 = inlined_call_operand.vmem [shape: bf16[128,128], index: 5, kind: input, shape index: {}]
  %s6 = inlined_call_operand.vmem [shape: f32[1,128], index: 6, kind: input, shape index: {}]
  %s7 = inlined_call_operand.vmem [shape: bf16[128,128], index: 7, kind: input, shape index: {}]
  %s8 = inlined_call_operand.vmem [shape: f32[1,128], index: 8, kind: input, shape index: {}]
  %s9 = inlined_call_operand.vmem [shape: bf16[128,128], index: 9, kind: input, shape index: {}]
  %s10 = inlined_call_operand.vmem [shape: f32[1,128], index: 10, kind: input, shape index: {}]
  %s11 = inlined_call_operand.vmem [shape: bf16[128,128], index: 11, kind: input, shape index: {}]
  %s12 = inlined_call_operand.vmem [shape: f32[1,128], index: 12, kind: input, shape index: {}]
  %s13 = inlined_call_operand.hbm [shape: f32[512,128], index: 13, kind: output, shape index: {}]
  %s14 = sld [smem:[#allocation0]]
  $region89: #{tpu_custom_call.1} parent=0
    _
  %s16 = ssub.s32 1, %s14
  %s17 = scalar_select 0, %s16, %s14
  $region1: #{tpu_custom_call.1} parent=0
    #allocation2 [shape = 'u8[8192]{0}', space=vmem, size = 0x2000, scoped, tag = 'input window, operand 1, single buffered']
    #allocation3 [shape = 's32[2]{0}', space=sflag, size = 0x8, scoped, tag = 'scoped memory for tpu_custom_call.1']
    #allocation4 [shape = 's32[2]{0}', space=sflag, size = 0x8, scoped, tag = 'scoped memory for tpu_custom_call.1']
    #allocation5 [shape = 'u8[262144]{0}', space=vmem, size = 0x40000, scoped, tag = 'output window, operand 0']
    %18 = vsyncpa [#allocation3], 0
    %19 = vsyncpa [#allocation4], 0
    %s20 = scalar_lea.sflag [#allocation4], 1
    %21 = vsyncpa %s20, 0
    loop: start=0, step=1, limit=4
    $region2: #{tpu_custom_call.1} parent=1 // loop_pre_header
      _
    $region3: #{tpu_custom_call.1} parent=1 // loop_header
      %s23 = sphi 0, %s27
      %p24 = scmp.ge.s32.totalorder %s23, 4
      %s33 = sphi 0, %s35
      %s36 = sphi 0, %s33
      %s37 = sphi 0, %s36
      %s53 = sphi 0, %s37
      %s57 = sphi 0, %s57
      %s59 = sphi 0, %s57
      %s60 = sphi 0, %s59
      %s74 = sphi 0, %s60
      %s78 = sphi 0, %s78
      %s80 = sphi 0, %s78
      %s81 = sphi 0, %s80
      %s95 = sphi 0, %s81
      %s99 = sphi 0, %s99
      %s101 = sphi 0, %s99
      %s102 = sphi 0, %s101
      %s116 = sphi 0, %s102
      %s120 = sphi 0, %s120
      %s122 = sphi 0, %s120
      %s123 = sphi 0, %s122
      %s137 = sphi 0, %s123
      %s141 = sphi 0, %s141
      %s143 = sphi 0, %s141
      %s144 = sphi 0, %s143
      %s158 = sphi 0, %s144
      %s162 = sphi 0, %s162
      %s164 = sphi 0, %s162
      %s165 = sphi 0, %s164
      %s179 = sphi 0, %s165
      %s183 = sphi 0, %s183
      %s185 = sphi 0, %s183
      %s186 = sphi 0, %s185
      %s200 = sphi 0, %s186
      %s204 = sphi 0, %s204
      %s206 = sphi 0, %s204
      %s207 = sphi 0, %s206
      %s221 = sphi 0, %s207
      %s225 = sphi 0, %s225
      %s227 = sphi 0, %s225
      %s228 = sphi 0, %s227
      %s242 = sphi 0, %s228
      %s246 = sphi 0, %s246
      %s248 = sphi 0, %s246
      %s249 = sphi 0, %s248
      %s263 = sphi 0, %s249
      %s267 = sphi 0, %s267
      %s269 = sphi 0, %s267
      %s270 = sphi 0, %s269
      %s284 = sphi 0, %s270
      %s288 = sphi 0, %s288
      %s290 = sphi 0, %s288
      %s291 = sphi 0, %s290
      %s305 = sphi 0, %s291
      %s311 = sphi 0, %s313
      %s314 = sphi 0, %s311
      %s315 = sphi 0, %s314
      %s331 = sphi 0, %s315
    $region4: #{tpu_custom_call.1} parent=1 // loop_header_branch
      %26 = sbr.rel (%p24) target = $region8
    $region5: #{tpu_custom_call.1} parent=1 // loop_body
      %s28 = ssub.s32 %s23, 1
      %s29 = ssub.s32 %s23, 2
      %s30 = sadd.s32 %s23, 1
      %s31 = ssub.s32 %s23, %s30
      %p32 = scmp.eq.s32.totalorder %s31, 0
      %s34 = sadd.s32 %s33, 1
      %s35 = scalar_select %p32, %s33, %s34
      %p38 = pneg %p32
      %p39 = scmp.eq.s32.totalorder %s23, 1
      %p40 = por %p38, %p39
      %p41 = scmp.ne.s32.totalorder %s33, %s36
      %p42 = scmp.eq.s32.totalorder %s23, 0
      %p43 = por %p41, %p42
      %p44 = scmp.ne.s32.totalorder %s33, %s36
      %p45 = scmp.eq.s32.totalorder %s28, 1
      %p46 = por %p44, %p45
      %p47 = scmp.ne.s32.totalorder %s36, %s37
      %p48 = scmp.eq.s32.totalorder %s28, 0
      %p49 = por %p47, %p48
      %p50 = scmp.ne.s32.totalorder %s36, %s37
      %p51 = scmp.eq.s32.totalorder %s29, 1
      %p52 = por %p50, %p51
      %p54 = scmp.ne.s32.totalorder %s37, %s53
      %p55 = scmp.eq.s32.totalorder %s29, 0
      %p56 = por %p54, %p55
      %s58 = sadd.s32 %s57, 1
      %p61 = scmp.eq.s32.totalorder %s23, 1
      %p62 = scmp.ne.s32.totalorder %s57, %s59
      %p63 = scmp.eq.s32.totalorder %s23, 0
      %p64 = por %p62, %p63
      %p65 = scmp.ne.s32.totalorder %s57, %s59
      %p66 = scmp.eq.s32.totalorder %s28, 1
      %p67 = por %p65, %p66
      %p68 = scmp.ne.s32.totalorder %s59, %s60
      %p69 = scmp.eq.s32.totalorder %s28, 0
      %p70 = por %p68, %p69
      %p71 = scmp.ne.s32.totalorder %s59, %s60
      %p72 = scmp.eq.s32.totalorder %s29, 1
      %p73 = por %p71, %p72
      %p75 = scmp.ne.s32.totalorder %s60, %s74
      %p76 = scmp.eq.s32.totalorder %s29, 0
      %p77 = por %p75, %p76
      %s79 = sadd.s32 %s78, 1
      %p82 = scmp.eq.s32.totalorder %s23, 1
      %p83 = scmp.ne.s32.totalorder %s78, %s80
      %p84 = scmp.eq.s32.totalorder %s23, 0
      %p85 = por %p83, %p84
      %p86 = scmp.ne.s32.totalorder %s78, %s80
      %p87 = scmp.eq.s32.totalorder %s28, 1
      %p88 = por %p86, %p87
      %p89 = scmp.ne.s32.totalorder %s80, %s81
      %p90 = scmp.eq.s32.totalorder %s28, 0
      %p91 = por %p89, %p90
      %p92 = scmp.ne.s32.totalorder %s80, %s81
      %p93 = scmp.eq.s32.totalorder %s29, 1
      %p94 = por %p92, %p93
      %p96 = scmp.ne.s32.totalorder %s81, %s95
      %p97 = scmp.eq.s32.totalorder %s29, 0
      %p98 = por %p96, %p97
      %s100 = sadd.s32 %s99, 1
      %p103 = scmp.eq.s32.totalorder %s23, 1
      %p104 = scmp.ne.s32.totalorder %s99, %s101
      %p105 = scmp.eq.s32.totalorder %s23, 0
      %p106 = por %p104, %p105
      %p107 = scmp.ne.s32.totalorder %s99, %s101
      %p108 = scmp.eq.s32.totalorder %s28, 1
      %p109 = por %p107, %p108
      %p110 = scmp.ne.s32.totalorder %s101, %s102
      %p111 = scmp.eq.s32.totalorder %s28, 0
      %p112 = por %p110, %p111
      %p113 = scmp.ne.s32.totalorder %s101, %s102
      %p114 = scmp.eq.s32.totalorder %s29, 1
      %p115 = por %p113, %p114
      %p117 = scmp.ne.s32.totalorder %s102, %s116
      %p118 = scmp.eq.s32.totalorder %s29, 0
      %p119 = por %p117, %p118
      %s121 = sadd.s32 %s120, 1
      %p124 = scmp.eq.s32.totalorder %s23, 1
      %p125 = scmp.ne.s32.totalorder %s120, %s122
      %p126 = scmp.eq.s32.totalorder %s23, 0
      %p127 = por %p125, %p126
      %p128 = scmp.ne.s32.totalorder %s120, %s122
      %p129 = scmp.eq.s32.totalorder %s28, 1
      %p130 = por %p128, %p129
      %p131 = scmp.ne.s32.totalorder %s122, %s123
      %p132 = scmp.eq.s32.totalorder %s28, 0
      %p133 = por %p131, %p132
      %p134 = scmp.ne.s32.totalorder %s122, %s123
      %p135 = scmp.eq.s32.totalorder %s29, 1
      %p136 = por %p134, %p135
      %p138 = scmp.ne.s32.totalorder %s123, %s137
      %p139 = scmp.eq.s32.totalorder %s29, 0
      %p140 = por %p138, %p139
      %s142 = sadd.s32 %s141, 1
      %p145 = scmp.eq.s32.totalorder %s23, 1
      %p146 = scmp.ne.s32.totalorder %s141, %s143
      %p147 = scmp.eq.s32.totalorder %s23, 0
      %p148 = por %p146, %p147
      %p149 = scmp.ne.s32.totalorder %s141, %s143
      %p150 = scmp.eq.s32.totalorder %s28, 1
      %p151 = por %p149, %p150
      %p152 = scmp.ne.s32.totalorder %s143, %s144
      %p153 = scmp.eq.s32.totalorder %s28, 0
      %p154 = por %p152, %p153
      %p155 = scmp.ne.s32.totalorder %s143, %s144
      %p156 = scmp.eq.s32.totalorder %s29, 1
      %p157 = por %p155, %p156
      %p159 = scmp.ne.s32.totalorder %s144, %s158
      %p160 = scmp.eq.s32.totalorder %s29, 0
      %p161 = por %p159, %p160
      %s163 = sadd.s32 %s162, 1
      %p166 = scmp.eq.s32.totalorder %s23, 1
      %p167 = scmp.ne.s32.totalorder %s162, %s164
      %p168 = scmp.eq.s32.totalorder %s23, 0
      %p169 = por %p167, %p168
      %p170 = scmp.ne.s32.totalorder %s162, %s164
      %p171 = scmp.eq.s32.totalorder %s28, 1
      %p172 = por %p170, %p171
      %p173 = scmp.ne.s32.totalorder %s164, %s165
      %p174 = scmp.eq.s32.totalorder %s28, 0
      %p175 = por %p173, %p174
      %p176 = scmp.ne.s32.totalorder %s164, %s165
      %p177 = scmp.eq.s32.totalorder %s29, 1
      %p178 = por %p176, %p177
      %p180 = scmp.ne.s32.totalorder %s165, %s179
      %p181 = scmp.eq.s32.totalorder %s29, 0
      %p182 = por %p180, %p181
      %s184 = sadd.s32 %s183, 1
      %p187 = scmp.eq.s32.totalorder %s23, 1
      %p188 = scmp.ne.s32.totalorder %s183, %s185
      %p189 = scmp.eq.s32.totalorder %s23, 0
      %p190 = por %p188, %p189
      %p191 = scmp.ne.s32.totalorder %s183, %s185
      %p192 = scmp.eq.s32.totalorder %s28, 1
      %p193 = por %p191, %p192
      %p194 = scmp.ne.s32.totalorder %s185, %s186
      %p195 = scmp.eq.s32.totalorder %s28, 0
      %p196 = por %p194, %p195
      %p197 = scmp.ne.s32.totalorder %s185, %s186
      %p198 = scmp.eq.s32.totalorder %s29, 1
      %p199 = por %p197, %p198
      %p201 = scmp.ne.s32.totalorder %s186, %s200
      %p202 = scmp.eq.s32.totalorder %s29, 0
      %p203 = por %p201, %p202
      %s205 = sadd.s32 %s204, 1
      %p208 = scmp.eq.s32.totalorder %s23, 1
      %p209 = scmp.ne.s32.totalorder %s204, %s206
      %p210 = scmp.eq.s32.totalorder %s23, 0
      %p211 = por %p209, %p210
      %p212 = scmp.ne.s32.totalorder %s204, %s206
      %p213 = scmp.eq.s32.totalorder %s28, 1
      %p214 = por %p212, %p213
      %p215 = scmp.ne.s32.totalorder %s206, %s207
      %p216 = scmp.eq.s32.totalorder %s28, 0
      %p217 = por %p215, %p216
      %p218 = scmp.ne.s32.totalorder %s206, %s207
      %p219 = scmp.eq.s32.totalorder %s29, 1
      %p220 = por %p218, %p219
      %p222 = scmp.ne.s32.totalorder %s207, %s221
      %p223 = scmp.eq.s32.totalorder %s29, 0
      %p224 = por %p222, %p223
      %s226 = sadd.s32 %s225, 1
      %p229 = scmp.eq.s32.totalorder %s23, 1
      %p230 = scmp.ne.s32.totalorder %s225, %s227
      %p231 = scmp.eq.s32.totalorder %s23, 0
      %p232 = por %p230, %p231
      %p233 = scmp.ne.s32.totalorder %s225, %s227
      %p234 = scmp.eq.s32.totalorder %s28, 1
      %p235 = por %p233, %p234
      %p236 = scmp.ne.s32.totalorder %s227, %s228
      %p237 = scmp.eq.s32.totalorder %s28, 0
      %p238 = por %p236, %p237
      %p239 = scmp.ne.s32.totalorder %s227, %s228
      %p240 = scmp.eq.s32.totalorder %s29, 1
      %p241 = por %p239, %p240
      %p243 = scmp.ne.s32.totalorder %s228, %s242
      %p244 = scmp.eq.s32.totalorder %s29, 0
      %p245 = por %p243, %p244
      %s247 = sadd.s32 %s246, 1
      %p250 = scmp.eq.s32.totalorder %s23, 1
      %p251 = scmp.ne.s32.totalorder %s246, %s248
      %p252 = scmp.eq.s32.totalorder %s23, 0
      %p253 = por %p251, %p252
      %p254 = scmp.ne.s32.totalorder %s246, %s248
      %p255 = scmp.eq.s32.totalorder %s28, 1
      %p256 = por %p254, %p255
      %p257 = scmp.ne.s32.totalorder %s248, %s249
      %p258 = scmp.eq.s32.totalorder %s28, 0
      %p259 = por %p257, %p258
      %p260 = scmp.ne.s32.totalorder %s248, %s249
      %p261 = scmp.eq.s32.totalorder %s29, 1
      %p262 = por %p260, %p261
      %p264 = scmp.ne.s32.totalorder %s249, %s263
      %p265 = scmp.eq.s32.totalorder %s29, 0
      %p266 = por %p264, %p265
      %s268 = sadd.s32 %s267, 1
      %p271 = scmp.eq.s32.totalorder %s23, 1
      %p272 = scmp.ne.s32.totalorder %s267, %s269
      %p273 = scmp.eq.s32.totalorder %s23, 0
      %p274 = por %p272, %p273
      %p275 = scmp.ne.s32.totalorder %s267, %s269
      %p276 = scmp.eq.s32.totalorder %s28, 1
      %p277 = por %p275, %p276
      %p278 = scmp.ne.s32.totalorder %s269, %s270
      %p279 = scmp.eq.s32.totalorder %s28, 0
      %p280 = por %p278, %p279
      %p281 = scmp.ne.s32.totalorder %s269, %s270
      %p282 = scmp.eq.s32.totalorder %s29, 1
      %p283 = por %p281, %p282
      %p285 = scmp.ne.s32.totalorder %s270, %s284
      %p286 = scmp.eq.s32.totalorder %s29, 0
      %p287 = por %p285, %p286
      %s289 = sadd.s32 %s288, 1
      %p292 = scmp.eq.s32.totalorder %s23, 1
      %p293 = scmp.ne.s32.totalorder %s288, %s290
      %p294 = scmp.eq.s32.totalorder %s23, 0
      %p295 = por %p293, %p294
      %p296 = scmp.ne.s32.totalorder %s288, %s290
      %p297 = scmp.eq.s32.totalorder %s28, 1
      %p298 = por %p296, %p297
      %p299 = scmp.ne.s32.totalorder %s290, %s291
      %p300 = scmp.eq.s32.totalorder %s28, 0
      %p301 = por %p299, %p300
      %p302 = scmp.ne.s32.totalorder %s290, %s291
      %p303 = scmp.eq.s32.totalorder %s29, 1
      %p304 = por %p302, %p303
      %p306 = scmp.ne.s32.totalorder %s291, %s305
      %p307 = scmp.eq.s32.totalorder %s29, 0
      %p308 = por %p306, %p307
      %s309 = ssub.s32 %s23, %s30
      %p310 = scmp.eq.s32.totalorder %s309, 0
      %s312 = sadd.s32 %s311, 1
      %s313 = scalar_select %p310, %s311, %s312
      %p316 = pneg %p310
      %p317 = scmp.eq.s32.totalorder %s23, 1
      %p318 = por %p316, %p317
      %p319 = scmp.ne.s32.totalorder %s311, %s314
      %p320 = scmp.eq.s32.totalorder %s23, 0
      %p321 = por %p319, %p320
      %p322 = scmp.ne.s32.totalorder %s311, %s314
      %p323 = scmp.eq.s32.totalorder %s28, 1
      %p324 = por %p322, %p323
      %p325 = scmp.ne.s32.totalorder %s314, %s315
      %p326 = scmp.eq.s32.totalorder %s28, 0
      %p327 = por %p325, %p326
      %p328 = scmp.ne.s32.totalorder %s314, %s315
      %p329 = scmp.eq.s32.totalorder %s29, 1
      %p330 = por %p328, %p329
      %p332 = scmp.ne.s32.totalorder %s315, %s331
      %p333 = scmp.eq.s32.totalorder %s29, 0
      %p334 = por %p332, %p333
      %p335 = scmp.le.s32.totalorder 1, %s23
      %p336 = scmp.lt.s32.totalorder %s23, 3
      %p337 = pnand %p335, %p336
      %p338 = pneg %p337
      // Predicated region
      $region9: #{tpu_custom_call.1} parent=5 // pred_check
        _
      $region10: #{tpu_custom_call.1} parent=5 // pred_check_branch
        %340 = sbr.rel (%p337) target = $region12
      $region11: #{tpu_custom_call.1} parent=5 // pred_region
        %s341 = ssub.s32 %s23, 1
        // Predicated region
        $region13: #{tpu_custom_call.1} parent=11 // pred_check
          %p342 = pneg %p70
        $region14: #{tpu_custom_call.1} parent=11 // pred_check_branch
          %344 = sbr.rel (%p342) target = $region16
        $region15: #{tpu_custom_call.1} parent=11 // pred_region
          %s346 = ssub.s32 256, 256
          %347 = vsyncadd [#allocation3], %s346
          %s348 = sshll.u32 [#allocation2], 4
          %s349 = int_to_ptr.vmem [resolvable:$true] %s348
          %354 = dma.hbm_to_vmem [thread:$0]  %s1, 256, %s349, [#allocation3], 64, 64, 4
        $region16: #{tpu_custom_call.1} parent=11 // pred_fallthru
          _
        // Predicated region
        $region17: #{tpu_custom_call.1} parent=11 // pred_check
          %p355 = pneg %p91
        $region18: #{tpu_custom_call.1} parent=11 // pred_check_branch
          %357 = sbr.rel (%p355) target = $region20
        $region19: #{tpu_custom_call.1} parent=11 // pred_region
          _
        $region20: #{tpu_custom_call.1} parent=11 // pred_fallthru
          _
        // Predicated region
        $region21: #{tpu_custom_call.1} parent=11 // pred_check
          %p358 = pneg %p112
        $region22: #{tpu_custom_call.1} parent=11 // pred_check_branch
          %360 = sbr.rel (%p358) target = $region24
        $region23: #{tpu_custom_call.1} parent=11 // pred_region
          _
        $region24: #{tpu_custom_call.1} parent=11 // pred_fallthru
          _
        // Predicated region
        $region25: #{tpu_custom_call.1} parent=11 // pred_check
          %p361 = pneg %p133
        $region26: #{tpu_custom_call.1} parent=11 // pred_check_branch
          %363 = sbr.rel (%p361) target = $region28
        $region27: #{tpu_custom_call.1} parent=11 // pred_region
          _
        $region28: #{tpu_custom_call.1} parent=11 // pred_fallthru
          _
        // Predicated region
        $region29: #{tpu_custom_call.1} parent=11 // pred_check
          %p364 = pneg %p154
        $region30: #{tpu_custom_call.1} parent=11 // pred_check_branch
          %366 = sbr.rel (%p364) target = $region32
        $region31: #{tpu_custom_call.1} parent=11 // pred_region
          _
        $region32: #{tpu_custom_call.1} parent=11 // pred_fallthru
          _
        // Predicated region
        $region33: #{tpu_custom_call.1} parent=11 // pred_check
          %p367 = pneg %p175
        $region34: #{tpu_custom_call.1} parent=11 // pred_check_branch
          %369 = sbr.rel (%p367) target = $region36
        $region35: #{tpu_custom_call.1} parent=11 // pred_region
          _
        $region36: #{tpu_custom_call.1} parent=11 // pred_fallthru
          _
        // Predicated region
        $region37: #{tpu_custom_call.1} parent=11 // pred_check
          %p370 = pneg %p196
        $region38: #{tpu_custom_call.1} parent=11 // pred_check_branch
          %372 = sbr.rel (%p370) target = $region40
        $region39: #{tpu_custom_call.1} parent=11 // pred_region
          _
        $region40: #{tpu_custom_call.1} parent=11 // pred_fallthru
          _
        // Predicated region
        $region41: #{tpu_custom_call.1} parent=11 // pred_check
          %p373 = pneg %p217
        $region42: #{tpu_custom_call.1} parent=11 // pred_check_branch
          %375 = sbr.rel (%p373) target = $region44
        $region43: #{tpu_custom_call.1} parent=11 // pred_region
          _
        $region44: #{tpu_custom_call.1} parent=11 // pred_fallthru
          _
        // Predicated region
        $region45: #{tpu_custom_call.1} parent=11 // pred_check
          %p376 = pneg %p238
        $region46: #{tpu_custom_call.1} parent=11 // pred_check_branch
          %378 = sbr.rel (%p376) target = $region48
        $region47: #{tpu_custom_call.1} parent=11 // pred_region
          _
        $region48: #{tpu_custom_call.1} parent=11 // pred_fallthru
          _
        // Predicated region
        $region49: #{tpu_custom_call.1} parent=11 // pred_check
          %p379 = pneg %p259
        $region50: #{tpu_custom_call.1} parent=11 // pred_check_branch
          %381 = sbr.rel (%p379) target = $region52
        $region51: #{tpu_custom_call.1} parent=11 // pred_region
          _
        $region52: #{tpu_custom_call.1} parent=11 // pred_fallthru
          _
        // Predicated region
        $region53: #{tpu_custom_call.1} parent=11 // pred_check
          %p382 = pneg %p280
        $region54: #{tpu_custom_call.1} parent=11 // pred_check_branch
          %384 = sbr.rel (%p382) target = $region56
        $region55: #{tpu_custom_call.1} parent=11 // pred_region
          _
        $region56: #{tpu_custom_call.1} parent=11 // pred_fallthru
          _
        // Predicated region
        $region57: #{tpu_custom_call.1} parent=11 // pred_check
          %p385 = pneg %p301
        $region58: #{tpu_custom_call.1} parent=11 // pred_check_branch
          %387 = sbr.rel (%p385) target = $region60
        $region59: #{tpu_custom_call.1} parent=11 // pred_region
          _
        $region60: #{tpu_custom_call.1} parent=11 // pred_fallthru
          _
      $region12: #{tpu_custom_call.1} parent=5 // pred_fallthru
        _
      %p388 = scmp.lt.s32.totalorder %s23, 2
      // Predicated region
      $region61: #{tpu_custom_call.1} parent=5 // pred_check
        %p389 = pneg %p388
      $region62: #{tpu_custom_call.1} parent=5 // pred_check_branch
        %391 = sbr.rel (%p389) target = $region64
      $region63: #{tpu_custom_call.1} parent=5 // pred_region
        // Predicated region
        $region65: #{tpu_custom_call.1} parent=63 // pred_check
          %p392 = pneg %p43
        $region66: #{tpu_custom_call.1} parent=63 // pred_check_branch
          %394 = sbr.rel (%p392) target = $region68
        $region67: #{tpu_custom_call.1} parent=63 // pred_region
          %s395 = smul.u32 32, %s23
          %p396 = scmp.lt.s32.totalorder %s395, 63
          %s397 = scalar_select %p396, %s395, 63
          %s398 = smul.addr %s397, 4
          %s399 = scalar_lea.vmem %s0, %s398
          %s400 = smul.u32 32, %s23
        $region68: #{tpu_custom_call.1} parent=63 // pred_fallthru
          _
      $region64: #{tpu_custom_call.1} parent=5 // pred_fallthru
        _
      %p401 = scmp.le.s32.totalorder 1, %s23
      %p402 = scmp.lt.s32.totalorder %s23, 3
      %p403 = pnand %p401, %p402
      %p404 = pneg %p403
      // Predicated region
      $region69: #{tpu_custom_call.1} parent=5 // pred_check
        _
      $region70: #{tpu_custom_call.1} parent=5 // pred_check_branch
        %406 = sbr.rel (%p403) target = $region72
      $region71: #{tpu_custom_call.1} parent=5 // pred_region
        %s407 = ssub.s32 %s23, 1
        // Predicated region
        $region73: #{tpu_custom_call.1} parent=71 // pred_check
          %p408 = pneg %p70
        $region74: #{tpu_custom_call.1} parent=71 // pred_check_branch
          %410 = sbr.rel (%p408) target = $region76
        $region75: #{tpu_custom_call.1} parent=71 // pred_region
          %411 = dma.done [#allocation3], 256
        $region76: #{tpu_custom_call.1} parent=71 // pred_fallthru
          _
        %s412 = smul.u32 32, %s28
        %p413 = scmp.lt.s32.totalorder %s412, 63
        %s414 = scalar_select %p413, %s412, 63
        %s415 = smul.addr %s414, 4
        %s416 = scalar_lea.vmem %s0, %s415
        %p417 = pneg %p49
        %p418 = pneg %p46
        %p419 = pneg %p70
        %p420 = pneg %p67
        %p421 = pneg %p91
        %p422 = pneg %p88
        %p423 = pneg %p112
        %p424 = pneg %p109
        %p425 = pneg %p133
        %p426 = pneg %p130
        %p427 = pneg %p154
        %p428 = pneg %p151
        %p429 = pneg %p175
        %p430 = pneg %p172
        %p431 = pneg %p196
        %p432 = pneg %p193
        %p433 = pneg %p217
        %p434 = pneg %p214
        %p435 = pneg %p238
        %p436 = pneg %p235
        %p437 = pneg %p259
        %p438 = pneg %p256
        %p439 = pneg %p280
        %p440 = pneg %p277
        %p441 = pneg %p301
        %p442 = pneg %p298
        %p443 = pneg %p327
        %p444 = pneg %p324
        %s445 = sand.u32 %s314, 1
        %s446 = scalar_lea.sflag [#allocation4], %s445
        %s447 = sand.u32 %s314, 1
        %s448 = smul.addr %s447, 256
        %s449 = scalar_lea.vmem [#allocation5], %s448
        %s450 = smul.u32 32, %s28
        %p451 = scmp.lt.s32.totalorder %s450, 63
        %s452 = scalar_select %p451, %s450, 63
        %s453 = smul.addr %s452, 4
        %s454 = scalar_lea.vmem %s0, %s453
        %s455 = smul.u32 32, %s28
        %s456 = smul.u32 32, %s28
        %v458 = vld [vmem:[%s454] sm:$0xf]
        %v459 = vld [vmem:[%s454 + $0x4] sm:$0xf]
        %v460 = vld [vmem:[%s454 + $0x8] sm:$0xf]
        %v461 = vld [vmem:[%s454 + $0xc] sm:$0xf]
        %v462 = vld [vmem:[%s454 + $0x10] sm:$0xf]
        %v463 = vld [vmem:[%s454 + $0x14] sm:$0xf]
        %v464 = vld [vmem:[%s454 + $0x18] sm:$0xf]
        %v465 = vld [vmem:[%s454 + $0x1c] sm:$0xf]
        %v466 = vld [vmem:[%s454 + $0x20] sm:$0xf]
        %v467 = vld [vmem:[%s454 + $0x24] sm:$0xf]
        %v468 = vld [vmem:[%s454 + $0x28] sm:$0xf]
        %v469 = vld [vmem:[%s454 + $0x2c] sm:$0xf]
        %v470 = vld [vmem:[%s454 + $0x30] sm:$0xf]
        %v471 = vld [vmem:[%s454 + $0x34] sm:$0xf]
        %v472 = vld [vmem:[%s454 + $0x38] sm:$0xf]
        %v473 = vld [vmem:[%s454 + $0x3c] sm:$0xf]
        %v474 = vld [vmem:[%s454 + $0x40] sm:$0xf]
        %v475 = vld [vmem:[%s454 + $0x44] sm:$0xf]
        %v476 = vld [vmem:[%s454 + $0x48] sm:$0xf]
        %v477 = vld [vmem:[%s454 + $0x4c] sm:$0xf]
        %v478 = vld [vmem:[%s454 + $0x50] sm:$0xf]
        %v479 = vld [vmem:[%s454 + $0x54] sm:$0xf]
        %v480 = vld [vmem:[%s454 + $0x58] sm:$0xf]
        %v481 = vld [vmem:[%s454 + $0x5c] sm:$0xf]
        %v482 = vld [vmem:[%s454 + $0x60] sm:$0xf]
        %v483 = vld [vmem:[%s454 + $0x64] sm:$0xf]
        %v484 = vld [vmem:[%s454 + $0x68] sm:$0xf]
        %v485 = vld [vmem:[%s454 + $0x6c] sm:$0xf]
        %v486 = vld [vmem:[%s454 + $0x70] sm:$0xf]
        %v487 = vld [vmem:[%s454 + $0x74] sm:$0xf]
        %v488 = vld [vmem:[%s454 + $0x78] sm:$0xf]
        %v489 = vld [vmem:[%s454 + $0x7c] sm:$0xf]
        %v490 = vld [vmem:[#allocation2] sm:$0xf]
        %v491 = vld [vmem:[#allocation2 + $0x4] sm:$0xf]
        %v492 = vld [vmem:[#allocation2 + $0x8] sm:$0xf]
        %v493 = vld [vmem:[#allocation2 + $0xc] sm:$0xf]
        %v494 = vld [vmem:[%s2] sm:$0x1]
        %v496 = vlaneseq
        %v497 = vshrl.u32 %v496, 7
        %v498 = vsub.s32 0, %v497
        %v499 = vrot.slane %v494, %v498
        %v533 = vunpack.c.l.b16 %v458
        %v534 = vunpack.c.l.b16 %v459
        %v535 = vunpack.c.l.b16 %v460
        %v536 = vunpack.c.l.b16 %v461
        %v537 = vunpack.c.l.b16 %v462
        %v538 = vunpack.c.l.b16 %v463
        %v539 = vunpack.c.l.b16 %v464
        %v540 = vunpack.c.l.b16 %v465
        %v541 = vunpack.c.l.b16 %v466
        %v542 = vunpack.c.l.b16 %v467
        %v543 = vunpack.c.l.b16 %v468
        %v544 = vunpack.c.l.b16 %v469
        %v545 = vunpack.c.l.b16 %v470
        %v546 = vunpack.c.l.b16 %v471
        %v547 = vunpack.c.l.b16 %v472
        %v548 = vunpack.c.l.b16 %v473
        %v549 = vunpack.c.l.b16 %v474
        %v550 = vunpack.c.l.b16 %v475
        %v551 = vunpack.c.l.b16 %v476
        %v552 = vunpack.c.l.b16 %v477
        %v553 = vunpack.c.l.b16 %v478
        %v554 = vunpack.c.l.b16 %v479
        %v555 = vunpack.c.l.b16 %v480
        %v556 = vunpack.c.l.b16 %v481
        %v557 = vunpack.c.l.b16 %v482
        %v558 = vunpack.c.l.b16 %v483
        %v559 = vunpack.c.l.b16 %v484
        %v560 = vunpack.c.l.b16 %v485
        %v561 = vunpack.c.l.b16 %v486
        %v562 = vunpack.c.l.b16 %v487
        %v563 = vunpack.c.l.b16 %v488
        %v564 = vunpack.c.l.b16 %v489
        %v565 = vpack.c.b16 %v534, %v533
        %v566 = vpack.c.b16 %v536, %v535
        %v567 = vpack.c.b16 %v538, %v537
        %v568 = vpack.c.b16 %v540, %v539
        %v569 = vpack.c.b16 %v542, %v541
        %v570 = vpack.c.b16 %v544, %v543
        %v571 = vpack.c.b16 %v546, %v545
        %v572 = vpack.c.b16 %v548, %v547
        %v573 = vpack.c.b16 %v550, %v549
        %v574 = vpack.c.b16 %v552, %v551
        %v575 = vpack.c.b16 %v554, %v553
        %v576 = vpack.c.b16 %v556, %v555
        %v577 = vpack.c.b16 %v558, %v557
        %v578 = vpack.c.b16 %v560, %v559
        %v579 = vpack.c.b16 %v562, %v561
        %v580 = vpack.c.b16 %v564, %v563
        %v585 = vunpack.c.l.b16 %v490
        %v586 = vunpack.c.l.b16 %v491
        %v587 = vunpack.c.l.b16 %v492
        %v588 = vunpack.c.l.b16 %v493
        %v589 = vpack.c.b16 %v586, %v585
        %v590 = vpack.c.b16 %v588, %v587
        %vm593 = vcmask 261120
        %v595 = vsel %vm593, %v565, 0
        %v598 = vsel %vm593, %v566, 0
        %v601 = vsel %vm593, %v567, 0
        %v604 = vsel %vm593, %v568, 0
        %v607 = vsel %vm593, %v569, 0
        %v610 = vsel %vm593, %v570, 0
        %v613 = vsel %vm593, %v571, 0
        %v616 = vsel %vm593, %v572, 0
        %v619 = vsel %vm593, %v573, 0
        %v622 = vsel %vm593, %v574, 0
        %v625 = vsel %vm593, %v575, 0
        %v628 = vsel %vm593, %v576, 0
        %v631 = vsel %vm593, %v577, 0
        %v634 = vsel %vm593, %v578, 0
        %v637 = vsel %vm593, %v579, 0
        %v640 = vsel %vm593, %v580, 0
        %642 = vmatprep.subr.bf16.mxu0 0
        %643 = vmatpush1.bf16.msra.mxu0 %v589
        %644 = vmatprep.subr.bf16.mxu0 0
        %645 = vmatpush1.bf16.msra.mxu0 %v590
        %646 = vmatprep.subr.bf16.mxu0 0
        %647 = vmatpush1.bf16.msra.mxu0 0
        %648 = vmatprep.subr.bf16.mxu0 0
        %649 = vmatpush1.bf16.msra.mxu0 0
        %650 = vmatprep.subr.bf16.mxu0 0
        %651 = vmatpush1.bf16.msra.mxu0 0
        %652 = vmatprep.subr.bf16.mxu0 0
        %653 = vmatpush1.bf16.msra.mxu0 0
        %654 = vmatprep.subr.bf16.mxu0 0
        %655 = vmatpush1.bf16.msra.mxu0 0
        %656 = vmatprep.subr.bf16.mxu0 0
        %657 = vmatpush1.bf16.msra.mxu0 0
        %658 = vmatprep.subr.bf16.mxu0 0
        %659 = vmatpush1.bf16.msra.mxu0 0
        %660 = vmatprep.subr.bf16.mxu0 0
        %661 = vmatpush1.bf16.msra.mxu0 0
        %662 = vmatprep.subr.bf16.mxu0 0
        %663 = vmatpush1.bf16.msra.mxu0 0
        %664 = vmatprep.subr.bf16.mxu0 0
        %665 = vmatpush1.bf16.msra.mxu0 0
        %666 = vmatprep.subr.bf16.mxu0 0
        %667 = vmatpush1.bf16.msra.mxu0 0
        %668 = vmatprep.subr.bf16.mxu0 0
        %669 = vmatpush1.bf16.msra.mxu0 0
        %670 = vmatprep.subr.bf16.mxu0 0
        %671 = vmatpush1.bf16.msra.mxu0 0
        %672 = vmatprep.subr.bf16.mxu0 0
        %673 = vmatpush1.bf16.msra.mxu0 0
        %674 = vmatprep.mubr.bf16.mxu0 0
        %675 = vmatmul.mubr.bf16.gmra.mrb[0].mxu0 %v595
        %v676 = vpop.f32.mrb[0].mxu0
        %v677 = vadd.f32 %v499, %v676
        %v678 = vpop.f32.mrb[0].mxu0
        %v679 = vpop.f32.mrb[0].mxu0
        %v680 = vadd.f32 %v499, %v679
        %v681 = vpop.f32.mrb[0].mxu0
        %682 = vmatprep.mubr.bf16.mxu0 0
        %683 = vmatmul.mubr.bf16.gmra.mrb[0].mxu0 %v598
        %v684 = vpop.f32.mrb[0].mxu0
        %v685 = vadd.f32 %v499, %v684
        %v686 = vpop.f32.mrb[0].mxu0
        %v687 = vpop.f32.mrb[0].mxu0
        %v688 = vadd.f32 %v499, %v687
        %v689 = vpop.f32.mrb[0].mxu0
        %690 = vmatprep.mubr.bf16.mxu0 0
        %691 = vmatmul.mubr.bf16.gmra.mrb[0].mxu0 %v601
        %v692 = vpop.f32.mrb[0].mxu0
        %v693 = vadd.f32 %v499, %v692
        %v694 = vpop.f32.mrb[0].mxu0
        %v695 = vpop.f32.mrb[0].mxu0
        %v696 = vadd.f32 %v499, %v695
        %v697 = vpop.f32.mrb[0].mxu0
        %698 = vmatprep.mubr.bf16.mxu0 0
        %699 = vmatmul.mubr.bf16.gmra.mrb[0].mxu0 %v604
        %v700 = vpop.f32.mrb[0].mxu0
        %v701 = vadd.f32 %v499, %v700
        %v702 = vpop.f32.mrb[0].mxu0
        %v703 = vpop.f32.mrb[0].mxu0
        %v704 = vadd.f32 %v499, %v703
        %v705 = vpop.f32.mrb[0].mxu0
        %706 = vmatprep.mubr.bf16.mxu0 0
        %707 = vmatmul.mubr.bf16.gmra.mrb[0].mxu0 %v607
        %v708 = vpop.f32.mrb[0].mxu0
        %v709 = vadd.f32 %v499, %v708
        %v710 = vpop.f32.mrb[0].mxu0
        %v711 = vpop.f32.mrb[0].mxu0
        %v712 = vadd.f32 %v499, %v711
        %v713 = vpop.f32.mrb[0].mxu0
        %714 = vmatprep.mubr.bf16.mxu0 0
        %715 = vmatmul.mubr.bf16.gmra.mrb[0].mxu0 %v610
        %v716 = vpop.f32.mrb[0].mxu0
        %v717 = vadd.f32 %v499, %v716
        %v718 = vpop.f32.mrb[0].mxu0
        %v719 = vpop.f32.mrb[0].mxu0
        %v720 = vadd.f32 %v499, %v719
        %v721 = vpop.f32.mrb[0].mxu0
        %722 = vmatprep.mubr.bf16.mxu0 0
        %723 = vmatmul.mubr.bf16.gmra.mrb[0].mxu0 %v613
        %v724 = vpop.f32.mrb[0].mxu0
        %v725 = vadd.f32 %v499, %v724
        %v726 = vpop.f32.mrb[0].mxu0
        %v727 = vpop.f32.mrb[0].mxu0
        %v728 = vadd.f32 %v499, %v727
        %v729 = vpop.f32.mrb[0].mxu0
        %730 = vmatprep.mubr.bf16.mxu0 0
        %731 = vmatmul.mubr.bf16.gmra.mrb[0].mxu0 %v616
        %v732 = vpop.f32.mrb[0].mxu0
        %v733 = vadd.f32 %v499, %v732
        %v734 = vpop.f32.mrb[0].mxu0
        %v735 = vpop.f32.mrb[0].mxu0
        %v736 = vadd.f32 %v499, %v735
        %v737 = vpop.f32.mrb[0].mxu0
        %738 = vmatprep.mubr.bf16.mxu0 0
        %739 = vmatmul.mubr.bf16.gmra.mrb[0].mxu0 %v619
        %v740 = vpop.f32.mrb[0].mxu0
        %v741 = vadd.f32 %v499, %v740
        %v742 = vpop.f32.mrb[0].mxu0
        %v743 = vpop.f32.mrb[0].mxu0
        %v744 = vadd.f32 %v499, %v743
        %v745 = vpop.f32.mrb[0].mxu0
        %746 = vmatprep.mubr.bf16.mxu0 0
        %747 = vmatmul.mubr.bf16.gmra.mrb[0].mxu0 %v622
        %v748 = vpop.f32.mrb[0].mxu0
        %v749 = vadd.f32 %v499, %v748
        %v750 = vpop.f32.mrb[0].mxu0
        %v751 = vpop.f32.mrb[0].mxu0
        %v752 = vadd.f32 %v499, %v751
        %v753 = vpop.f32.mrb[0].mxu0
        %754 = vmatprep.mubr.bf16.mxu0 0
        %755 = vmatmul.mubr.bf16.gmra.mrb[0].mxu0 %v625
        %v756 = vpop.f32.mrb[0].mxu0
        %v757 = vadd.f32 %v499, %v756
        %v758 = vpop.f32.mrb[0].mxu0
        %v759 = vpop.f32.mrb[0].mxu0
        %v760 = vadd.f32 %v499, %v759
        %v761 = vpop.f32.mrb[0].mxu0
        %762 = vmatprep.mubr.bf16.mxu0 0
        %763 = vmatmul.mubr.bf16.gmra.mrb[0].mxu0 %v628
        %v764 = vpop.f32.mrb[0].mxu0
        %v765 = vadd.f32 %v499, %v764
        %v766 = vpop.f32.mrb[0].mxu0
        %v767 = vpop.f32.mrb[0].mxu0
        %v768 = vadd.f32 %v499, %v767
        %v769 = vpop.f32.mrb[0].mxu0
        %770 = vmatprep.mubr.bf16.mxu0 0
        %771 = vmatmul.mubr.bf16.gmra.mrb[0].mxu0 %v631
        %v772 = vpop.f32.mrb[0].mxu0
        %v773 = vadd.f32 %v499, %v772
        %v774 = vpop.f32.mrb[0].mxu0
        %v775 = vpop.f32.mrb[0].mxu0
        %v776 = vadd.f32 %v499, %v775
        %v777 = vpop.f32.mrb[0].mxu0
        %778 = vmatprep.mubr.bf16.mxu0 0
        %779 = vmatmul.mubr.bf16.gmra.mrb[0].mxu0 %v634
        %v780 = vpop.f32.mrb[0].mxu0
        %v781 = vadd.f32 %v499, %v780
        %v782 = vpop.f32.mrb[0].mxu0
        %v783 = vpop.f32.mrb[0].mxu0
        %v784 = vadd.f32 %v499, %v783
        %v785 = vpop.f32.mrb[0].mxu0
        %786 = vmatprep.mubr.bf16.mxu0 0
        %787 = vmatmul.mubr.bf16.gmra.mrb[0].mxu0 %v637
        %v788 = vpop.f32.mrb[0].mxu0
        %v789 = vadd.f32 %v499, %v788
        %v790 = vpop.f32.mrb[0].mxu0
        %v791 = vpop.f32.mrb[0].mxu0
        %v792 = vadd.f32 %v499, %v791
        %v793 = vpop.f32.mrb[0].mxu0
        %794 = vmatprep.mubr.bf16.mxu0 0
        %795 = vmatmul.mubr.bf16.gmra.mrb[0].mxu0 %v640
        %v796 = vpop.f32.mrb[0].mxu0
        %v797 = vadd.f32 %v499, %v796
        %v798 = vpop.f32.mrb[0].mxu0
        %v799 = vpop.f32.mrb[0].mxu0
        %v800 = vadd.f32 %v499, %v799
        %v801 = vpop.f32.mrb[0].mxu0
        %802 = vdwg.mxu0
        %v803 = vmax.f32 %v677, 0.0
        %v804 = vmax.f32 %v680, 0.0
        %v805 = vmax.f32 %v685, 0.0
        %v806 = vmax.f32 %v688, 0.0
        %v807 = vmax.f32 %v693, 0.0
        %v808 = vmax.f32 %v696, 0.0
        %v809 = vmax.f32 %v701, 0.0
        %v810 = vmax.f32 %v704, 0.0
        %v811 = vmax.f32 %v709, 0.0
        %v812 = vmax.f32 %v712, 0.0
        %v813 = vmax.f32 %v717, 0.0
        %v814 = vmax.f32 %v720, 0.0
        %v815 = vmax.f32 %v725, 0.0
        %v816 = vmax.f32 %v728, 0.0
        %v817 = vmax.f32 %v733, 0.0
        %v818 = vmax.f32 %v736, 0.0
        %v819 = vmax.f32 %v741, 0.0
        %v820 = vmax.f32 %v744, 0.0
        %v821 = vmax.f32 %v749, 0.0
        %v822 = vmax.f32 %v752, 0.0
        %v823 = vmax.f32 %v757, 0.0
        %v824 = vmax.f32 %v760, 0.0
        %v825 = vmax.f32 %v765, 0.0
        %v826 = vmax.f32 %v768, 0.0
        %v827 = vmax.f32 %v773, 0.0
        %v828 = vmax.f32 %v776, 0.0
        %v829 = vmax.f32 %v781, 0.0
        %v830 = vmax.f32 %v784, 0.0
        %v831 = vmax.f32 %v789, 0.0
        %v832 = vmax.f32 %v792, 0.0
        %v833 = vmax.f32 %v797, 0.0
        %v834 = vmax.f32 %v800, 0.0
        %v835 = vpack.c.bf16 %v804, %v803
        %v836 = vpack.c.bf16 %v806, %v805
        %v837 = vpack.c.bf16 %v808, %v807
        %v838 = vpack.c.bf16 %v810, %v809
        %v839 = vpack.c.bf16 %v812, %v811
        %v840 = vpack.c.bf16 %v814, %v813
        %v841 = vpack.c.bf16 %v816, %v815
        %v842 = vpack.c.bf16 %v818, %v817
        %v843 = vpack.c.bf16 %v820, %v819
        %v844 = vpack.c.bf16 %v822, %v821
        %v845 = vpack.c.bf16 %v824, %v823
        %v846 = vpack.c.bf16 %v826, %v825
        %v847 = vpack.c.bf16 %v828, %v827
        %v848 = vpack.c.bf16 %v830, %v829
        %v849 = vpack.c.bf16 %v832, %v831
        %v850 = vpack.c.bf16 %v834, %v833
        %v851 = vld [vmem:[%s3] sm:$0xf]
        %v852 = vld [vmem:[%s3 + $0x4] sm:$0xf]
        %v853 = vld [vmem:[%s3 + $0x8] sm:$0xf]
        %v854 = vld [vmem:[%s3 + $0xc] sm:$0xf]
        %v855 = vld [vmem:[%s3 + $0x10] sm:$0xf]
        %v856 = vld [vmem:[%s3 + $0x14] sm:$0xf]
        %v857 = vld [vmem:[%s3 + $0x18] sm:$0xf]
        %v858 = vld [vmem:[%s3 + $0x1c] sm:$0xf]
        %v859 = vld [vmem:[%s3 + $0x20] sm:$0xf]
        %v860 = vld [vmem:[%s3 + $0x24] sm:$0xf]
        %v861 = vld [vmem:[%s3 + $0x28] sm:$0xf]
        %v862 = vld [vmem:[%s3 + $0x2c] sm:$0xf]
        %v863 = vld [vmem:[%s3 + $0x30] sm:$0xf]
        %v864 = vld [vmem:[%s3 + $0x34] sm:$0xf]
        %v865 = vld [vmem:[%s3 + $0x38] sm:$0xf]
        %v866 = vld [vmem:[%s3 + $0x3c] sm:$0xf]
        %v867 = vld [vmem:[%s4] sm:$0x1]
        %v869 = vlaneseq
        %v870 = vshrl.u32 %v869, 7
        %v871 = vsub.s32 0, %v870
        %v872 = vrot.slane %v867, %v871
        %v890 = vunpack.c.l.b16 %v851
        %v891 = vunpack.c.l.b16 %v852
        %v892 = vunpack.c.l.b16 %v853
        %v893 = vunpack.c.l.b16 %v854
        %v894 = vunpack.c.l.b16 %v855
        %v895 = vunpack.c.l.b16 %v856
        %v896 = vunpack.c.l.b16 %v857
        %v897 = vunpack.c.l.b16 %v858
        %v898 = vunpack.c.l.b16 %v859
        %v899 = vunpack.c.l.b16 %v860
        %v900 = vunpack.c.l.b16 %v861
        %v901 = vunpack.c.l.b16 %v862
        %v902 = vunpack.c.l.b16 %v863
        %v903 = vunpack.c.l.b16 %v864
        %v904 = vunpack.c.l.b16 %v865
        %v905 = vunpack.c.l.b16 %v866
        %v906 = vpack.c.b16 %v891, %v890
        %v907 = vpack.c.b16 %v893, %v892
        %v908 = vpack.c.b16 %v895, %v894
        %v909 = vpack.c.b16 %v897, %v896
        %v910 = vpack.c.b16 %v899, %v898
        %v911 = vpack.c.b16 %v901, %v900
        %v912 = vpack.c.b16 %v903, %v902
        %v913 = vpack.c.b16 %v905, %v904
        %922 = vmatprep.subr.bf16.mxu0 0
        %923 = vmatpush1.bf16.msra.mxu0 %v906
        %924 = vmatprep.subr.bf16.mxu0 0
        %925 = vmatpush1.bf16.msra.mxu0 %v907
        %926 = vmatprep.subr.bf16.mxu0 0
        %927 = vmatpush1.bf16.msra.mxu0 %v908
        %928 = vmatprep.subr.bf16.mxu0 0
        %929 = vmatpush1.bf16.msra.mxu0 %v909
        %930 = vmatprep.subr.bf16.mxu0 0
        %931 = vmatpush1.bf16.msra.mxu0 %v910
        %932 = vmatprep.subr.bf16.mxu0 0
        %933 = vmatpush1.bf16.msra.mxu0 %v911
        %934 = vmatprep.subr.bf16.mxu0 0
        %935 = vmatpush1.bf16.msra.mxu0 %v912
        %936 = vmatprep.subr.bf16.mxu0 0
        %937 = vmatpush1.bf16.msra.mxu0 %v913
        %938 = vmatprep.subr.bf16.mxu0 0
        %939 = vmatpush1.bf16.msra.mxu0 0
        %940 = vmatprep.subr.bf16.mxu0 0
        %941 = vmatpush1.bf16.msra.mxu0 0
        %942 = vmatprep.subr.bf16.mxu0 0
        %943 = vmatpush1.bf16.msra.mxu0 0
        %944 = vmatprep.subr.bf16.mxu0 0
        %945 = vmatpush1.bf16.msra.mxu0 0
        %946 = vmatprep.subr.bf16.mxu0 0
        %947 = vmatpush1.bf16.msra.mxu0 0
        %948 = vmatprep.subr.bf16.mxu0 0
        %949 = vmatpush1.bf16.msra.mxu0 0
        %950 = vmatprep.subr.bf16.mxu0 0
        %951 = vmatpush1.bf16.msra.mxu0 0
        %952 = vmatprep.subr.bf16.mxu0 0
        %953 = vmatpush1.bf16.msra.mxu0 0
        %954 = vmatprep.mubr.bf16.mxu0 0
        %955 = vmatmul.mubr.bf16.gmra.mrb[0].mxu0 %v835
        %v956 = vpop.f32.mrb[0].mxu0
        %v957 = vadd.f32 %v872, %v956
        %v958 = vpop.f32.mrb[0].mxu0
        %v959 = vpop.f32.mrb[0].mxu0
        %v960 = vadd.f32 %v872, %v959
        %v961 = vpop.f32.mrb[0].mxu0
        %962 = vmatprep.mubr.bf16.mxu0 0
        %963 = vmatmul.mubr.bf16.gmra.mrb[0].mxu0 %v836
        %v964 = vpop.f32.mrb[0].mxu0
        %v965 = vadd.f32 %v872, %v964
        %v966 = vpop.f32.mrb[0].mxu0
        %v967 = vpop.f32.mrb[0].mxu0
        %v968 = vadd.f32 %v872, %v967
        %v969 = vpop.f32.mrb[0].mxu0
        %970 = vmatprep.mubr.bf16.mxu0 0
        %971 = vmatmul.mubr.bf16.gmra.mrb[0].mxu0 %v837
        %v972 = vpop.f32.mrb[0].mxu0
        %v973 = vadd.f32 %v872, %v972
        %v974 = vpop.f32.mrb[0].mxu0
        %v975 = vpop.f32.mrb[0].mxu0
        %v976 = vadd.f32 %v872, %v975
        %v977 = vpop.f32.mrb[0].mxu0
        %978 = vmatprep.mubr.bf16.mxu0 0
        %979 = vmatmul.mubr.bf16.gmra.mrb[0].mxu0 %v838
        %v980 = vpop.f32.mrb[0].mxu0
        %v981 = vadd.f32 %v872, %v980
        %v982 = vpop.f32.mrb[0].mxu0
        %v983 = vpop.f32.mrb[0].mxu0
        %v984 = vadd.f32 %v872, %v983
        %v985 = vpop.f32.mrb[0].mxu0
        %986 = vmatprep.mubr.bf16.mxu0 0
        %987 = vmatmul.mubr.bf16.gmra.mrb[0].mxu0 %v839
        %v988 = vpop.f32.mrb[0].mxu0
        %v989 = vadd.f32 %v872, %v988
        %v990 = vpop.f32.mrb[0].mxu0
        %v991 = vpop.f32.mrb[0].mxu0
        %v992 = vadd.f32 %v872, %v991
        %v993 = vpop.f32.mrb[0].mxu0
        %994 = vmatprep.mubr.bf16.mxu0 0
        %995 = vmatmul.mubr.bf16.gmra.mrb[0].mxu0 %v840
        %v996 = vpop.f32.mrb[0].mxu0
        %v997 = vadd.f32 %v872, %v996
        %v998 = vpop.f32.mrb[0].mxu0
        %v999 = vpop.f32.mrb[0].mxu0
        %v1000 = vadd.f32 %v872, %v999
        %v1001 = vpop.f32.mrb[0].mxu0
        %1002 = vmatprep.mubr.bf16.mxu0 0
        %1003 = vmatmul.mubr.bf16.gmra.mrb[0].mxu0 %v841
        %v1004 = vpop.f32.mrb[0].mxu0
        %v1005 = vadd.f32 %v872, %v1004
        %v1006 = vpop.f32.mrb[0].mxu0
        %v1007 = vpop.f32.mrb[0].mxu0
        %v1008 = vadd.f32 %v872, %v1007
        %v1009 = vpop.f32.mrb[0].mxu0
        %1010 = vmatprep.mubr.bf16.mxu0 0
        %1011 = vmatmul.mubr.bf16.gmra.mrb[0].mxu0 %v842
        %v1012 = vpop.f32.mrb[0].mxu0
        %v1013 = vadd.f32 %v872, %v1012
        %v1014 = vpop.f32.mrb[0].mxu0
        %v1015 = vpop.f32.mrb[0].mxu0
        %v1016 = vadd.f32 %v872, %v1015
        %v1017 = vpop.f32.mrb[0].mxu0
        %1018 = vmatprep.mubr.bf16.mxu0 0
        %1019 = vmatmul.mubr.bf16.gmra.mrb[0].mxu0 %v843
        %v1020 = vpop.f32.mrb[0].mxu0
        %v1021 = vadd.f32 %v872, %v1020
        %v1022 = vpop.f32.mrb[0].mxu0
        %v1023 = vpop.f32.mrb[0].mxu0
        %v1024 = vadd.f32 %v872, %v1023
        %v1025 = vpop.f32.mrb[0].mxu0
        %1026 = vmatprep.mubr.bf16.mxu0 0
        %1027 = vmatmul.mubr.bf16.gmra.mrb[0].mxu0 %v844
        %v1028 = vpop.f32.mrb[0].mxu0
        %v1029 = vadd.f32 %v872, %v1028
        %v1030 = vpop.f32.mrb[0].mxu0
        %v1031 = vpop.f32.mrb[0].mxu0
        %v1032 = vadd.f32 %v872, %v1031
        %v1033 = vpop.f32.mrb[0].mxu0
        %1034 = vmatprep.mubr.bf16.mxu0 0
        %1035 = vmatmul.mubr.bf16.gmra.mrb[0].mxu0 %v845
        %v1036 = vpop.f32.mrb[0].mxu0
        %v1037 = vadd.f32 %v872, %v1036
        %v1038 = vpop.f32.mrb[0].mxu0
        %v1039 = vpop.f32.mrb[0].mxu0
        %v1040 = vadd.f32 %v872, %v1039
        %v1041 = vpop.f32.mrb[0].mxu0
        %1042 = vmatprep.mubr.bf16.mxu0 0
        %1043 = vmatmul.mubr.bf16.gmra.mrb[0].mxu0 %v846
        %v1044 = vpop.f32.mrb[0].mxu0
        %v1045 = vadd.f32 %v872, %v1044
        %v1046 = vpop.f32.mrb[0].mxu0
        %v1047 = vpop.f32.mrb[0].mxu0
        %v1048 = vadd.f32 %v872, %v1047
        %v1049 = vpop.f32.mrb[0].mxu0
        %1050 = vmatprep.mubr.bf16.mxu0 0
        %1051 = vmatmul.mubr.bf16.gmra.mrb[0].mxu0 %v847
        %v1052 = vpop.f32.mrb[0].mxu0
        %v1053 = vadd.f32 %v872, %v1052
        %v1054 = vpop.f32.mrb[0].mxu0
        %v1055 = vpop.f32.mrb[0].mxu0
        %v1056 = vadd.f32 %v872, %v1055
        %v1057 = vpop.f32.mrb[0].mxu0
        %1058 = vmatprep.mubr.bf16.mxu0 0
        %1059 = vmatmul.mubr.bf16.gmra.mrb[0].mxu0 %v848
        %v1060 = vpop.f32.mrb[0].mxu0
        %v1061 = vadd.f32 %v872, %v1060
        %v1062 = vpop.f32.mrb[0].mxu0
        %v1063 = vpop.f32.mrb[0].mxu0
        %v1064 = vadd.f32 %v872, %v1063
        %v1065 = vpop.f32.mrb[0].mxu0
        %1066 = vmatprep.mubr.bf16.mxu0 0
        %1067 = vmatmul.mubr.bf16.gmra.mrb[0].mxu0 %v849
        %v1068 = vpop.f32.mrb[0].mxu0
        %v1069 = vadd.f32 %v872, %v1068
        %v1070 = vpop.f32.mrb[0].mxu0
        %v1071 = vpop.f32.mrb[0].mxu0
        %v1072 = vadd.f32 %v872, %v1071
        %v1073 = vpop.f32.mrb[0].mxu0
        %1074 = vmatprep.mubr.bf16.mxu0 0
        %1075 = vmatmul.mubr.bf16.gmra.mrb[0].mxu0 %v850
        %v1076 = vpop.f32.mrb[0].mxu0
        %v1077 = vadd.f32 %v872, %v1076
        %v1078 = vpop.f32.mrb[0].mxu0
        %v1079 = vpop.f32.mrb[0].mxu0
        %v1080 = vadd.f32 %v872, %v1079
        %v1081 = vpop.f32.mrb[0].mxu0
        %1082 = vdwg.mxu0
        %v1083 = vmax.f32 %v957, 0.0
        %v1084 = vmax.f32 %v960, 0.0
        %v1085 = vmax.f32 %v965, 0.0
        %v1086 = vmax.f32 %v968, 0.0
        %v1087 = vmax.f32 %v973, 0.0
        %v1088 = vmax.f32 %v976, 0.0
        %v1089 = vmax.f32 %v981, 0.0
        %v1090 = vmax.f32 %v984, 0.0
        %v1091 = vmax.f32 %v989, 0.0
        %v1092 = vmax.f32 %v992, 0.0
        %v1093 = vmax.f32 %v997, 0.0
        %v1094 = vmax.f32 %v1000, 0.0
        %v1095 = vmax.f32 %v1005, 0.0
        %v1096 = vmax.f32 %v1008, 0.0
        %v1097 = vmax.f32 %v1013, 0.0
        %v1098 = vmax.f32 %v1016, 0.0
        %v1099 = vmax.f32 %v1021, 0.0
        %v1100 = vmax.f32 %v1024, 0.0
        %v1101 = vmax.f32 %v1029, 0.0
        %v1102 = vmax.f32 %v1032, 0.0
        %v1103 = vmax.f32 %v1037, 0.0
        %v1104 = vmax.f32 %v1040, 0.0
        %v1105 = vmax.f32 %v1045, 0.0
        %v1106 = vmax.f32 %v1048, 0.0
        %v1107 = vmax.f32 %v1053, 0.0
        %v1108 = vmax.f32 %v1056, 0.0
        %v1109 = vmax.f32 %v1061, 0.0
        %v1110 = vmax.f32 %v1064, 0.0
        %v1111 = vmax.f32 %v1069, 0.0
        %v1112 = vmax.f32 %v1072, 0.0
        %v1113 = vmax.f32 %v1077, 0.0
        %v1114 = vmax.f32 %v1080, 0.0
        %v1115 = vpack.c.bf16 %v1084, %v1083
        %v1116 = vpack.c.bf16 %v1086, %v1085
        %v1117 = vpack.c.bf16 %v1088, %v1087
        %v1118 = vpack.c.bf16 %v1090, %v1089
        %v1119 = vpack.c.bf16 %v1092, %v1091
        %v1120 = vpack.c.bf16 %v1094, %v1093
        %v1121 = vpack.c.bf16 %v1096, %v1095
        %v1122 = vpack.c.bf16 %v1098, %v1097
        %v1123 = vpack.c.bf16 %v1100, %v1099
        %v1124 = vpack.c.bf16 %v1102, %v1101
        %v1125 = vpack.c.bf16 %v1104, %v1103
        %v1126 = vpack.c.bf16 %v1106, %v1105
        %v1127 = vpack.c.bf16 %v1108, %v1107
        %v1128 = vpack.c.bf16 %v1110, %v1109
        %v1129 = vpack.c.bf16 %v1112, %v1111
        %v1130 = vpack.c.bf16 %v1114, %v1113
        %v1131 = vld [vmem:[%s5] sm:$0xf]
        %v1132 = vld [vmem:[%s5 + $0x4] sm:$0xf]
        %v1133 = vld [vmem:[%s5 + $0x8] sm:$0xf]
        %v1134 = vld [vmem:[%s5 + $0xc] sm:$0xf]
        %v1135 = vld [vmem:[%s5 + $0x10] sm:$0xf]
        %v1136 = vld [vmem:[%s5 + $0x14] sm:$0xf]
        %v1137 = vld [vmem:[%s5 + $0x18] sm:$0xf]
        %v1138 = vld [vmem:[%s5 + $0x1c] sm:$0xf]
        %v1139 = vld [vmem:[%s5 + $0x20] sm:$0xf]
        %v1140 = vld [vmem:[%s5 + $0x24] sm:$0xf]
        %v1141 = vld [vmem:[%s5 + $0x28] sm:$0xf]
        %v1142 = vld [vmem:[%s5 + $0x2c] sm:$0xf]
        %v1143 = vld [vmem:[%s5 + $0x30] sm:$0xf]
        %v1144 = vld [vmem:[%s5 + $0x34] sm:$0xf]
        %v1145 = vld [vmem:[%s5 + $0x38] sm:$0xf]
        %v1146 = vld [vmem:[%s5 + $0x3c] sm:$0xf]
        %v1147 = vld [vmem:[%s6] sm:$0x1]
        %v1149 = vlaneseq
        %v1150 = vshrl.u32 %v1149, 7
        %v1151 = vsub.s32 0, %v1150
        %v1152 = vrot.slane %v1147, %v1151
        %v1170 = vunpack.c.l.b16 %v1131
        %v1171 = vunpack.c.l.b16 %v1132
        %v1172 = vunpack.c.l.b16 %v1133
        %v1173 = vunpack.c.l.b16 %v1134
        %v1174 = vunpack.c.l.b16 %v1135
        %v1175 = vunpack.c.l.b16 %v1136
        %v1176 = vunpack.c.l.b16 %v1137
        %v1177 = vunpack.c.l.b16 %v1138
        %v1178 = vunpack.c.l.b16 %v1139
        %v1179 = vunpack.c.l.b16 %v1140
        %v1180 = vunpack.c.l.b16 %v1141
        %v1181 = vunpack.c.l.b16 %v1142
        %v1182 = vunpack.c.l.b16 %v1143
        %v1183 = vunpack.c.l.b16 %v1144
        %v1184 = vunpack.c.l.b16 %v1145
        %v1185 = vunpack.c.l.b16 %v1146
        %v1186 = vpack.c.b16 %v1171, %v1170
        %v1187 = vpack.c.b16 %v1173, %v1172
        %v1188 = vpack.c.b16 %v1175, %v1174
        %v1189 = vpack.c.b16 %v1177, %v1176
        %v1190 = vpack.c.b16 %v1179, %v1178
        %v1191 = vpack.c.b16 %v1181, %v1180
        %v1192 = vpack.c.b16 %v1183, %v1182
        %v1193 = vpack.c.b16 %v1185, %v1184
        %1202 = vmatprep.subr.bf16.mxu0 0
        %1203 = vmatpush1.bf16.msra.mxu0 %v1186
        %1204 = vmatprep.subr.bf16.mxu0 0
        %1205 = vmatpush1.bf16.msra.mxu0 %v1187
        %1206 = vmatprep.subr.bf16.mxu0 0
        %1207 = vmatpush1.bf16.msra.mxu0 %v1188
        %1208 = vmatprep.subr.bf16.mxu0 0
        %1209 = vmatpush1.bf16.msra.mxu0 %v1189
        %1210 = vmatprep.subr.bf16.mxu0 0
        %1211 = vmatpush1.bf16.msra.mxu0 %v1190
        %1212 = vmatprep.subr.bf16.mxu0 0
        %1213 = vmatpush1.bf16.msra.mxu0 %v1191
        %1214 = vmatprep.subr.bf16.mxu0 0
        %1215 = vmatpush1.bf16.msra.mxu0 %v1192
        %1216 = vmatprep.subr.bf16.mxu0 0
        %1217 = vmatpush1.bf16.msra.mxu0 %v1193
        %1218 = vmatprep.subr.bf16.mxu0 0
        %1219 = vmatpush1.bf16.msra.mxu0 0
        %1220 = vmatprep.subr.bf16.mxu0 0
        %1221 = vmatpush1.bf16.msra.mxu0 0
        %1222 = vmatprep.subr.bf16.mxu0 0
        %1223 = vmatpush1.bf16.msra.mxu0 0
        %1224 = vmatprep.subr.bf16.mxu0 0
        %1225 = vmatpush1.bf16.msra.mxu0 0
        %1226 = vmatprep.subr.bf16.mxu0 0
        %1227 = vmatpush1.bf16.msra.mxu0 0
        %1228 = vmatprep.subr.bf16.mxu0 0
        %1229 = vmatpush1.bf16.msra.mxu0 0
        %1230 = vmatprep.subr.bf16.mxu0 0
        %1231 = vmatpush1.bf16.msra.mxu0 0
        %1232 = vmatprep.subr.bf16.mxu0 0
        %1233 = vmatpush1.bf16.msra.mxu0 0
        %1234 = vmatprep.mubr.bf16.mxu0 0
        %1235 = vmatmul.mubr.bf16.gmra.mrb[0].mxu0 %v1115
        %v1236 = vpop.f32.mrb[0].mxu0
        %v1237 = vadd.f32 %v1152, %v1236
        %v1238 = vpop.f32.mrb[0].mxu0
        %v1239 = vpop.f32.mrb[0].mxu0
        %v1240 = vadd.f32 %v1152, %v1239
        %v1241 = vpop.f32.mrb[0].mxu0
        %1242 = vmatprep.mubr.bf16.mxu0 0
        %1243 = vmatmul.mubr.bf16.gmra.mrb[0].mxu0 %v1116
        %v1244 = vpop.f32.mrb[0].mxu0
        %v1245 = vadd.f32 %v1152, %v1244
        %v1246 = vpop.f32.mrb[0].mxu0
        %v1247 = vpop.f32.mrb[0].mxu0
        %v1248 = vadd.f32 %v1152, %v1247
        %v1249 = vpop.f32.mrb[0].mxu0
        %1250 = vmatprep.mubr.bf16.mxu0 0
        %1251 = vmatmul.mubr.bf16.gmra.mrb[0].mxu0 %v1117
        %v1252 = vpop.f32.mrb[0].mxu0
        %v1253 = vadd.f32 %v1152, %v1252
        %v1254 = vpop.f32.mrb[0].mxu0
        %v1255 = vpop.f32.mrb[0].mxu0
        %v1256 = vadd.f32 %v1152, %v1255
        %v1257 = vpop.f32.mrb[0].mxu0
        %1258 = vmatprep.mubr.bf16.mxu0 0
        %1259 = vmatmul.mubr.bf16.gmra.mrb[0].mxu0 %v1118
        %v1260 = vpop.f32.mrb[0].mxu0
        %v1261 = vadd.f32 %v1152, %v1260
        %v1262 = vpop.f32.mrb[0].mxu0
        %v1263 = vpop.f32.mrb[0].mxu0
        %v1264 = vadd.f32 %v1152, %v1263
        %v1265 = vpop.f32.mrb[0].mxu0
        %1266 = vmatprep.mubr.bf16.mxu0 0
        %1267 = vmatmul.mubr.bf16.gmra.mrb[0].mxu0 %v1119
        %v1268 = vpop.f32.mrb[0].mxu0
        %v1269 = vadd.f32 %v1152, %v1268
        %v1270 = vpop.f32.mrb[0].mxu0
        %v1271 = vpop.f32.mrb[0].mxu0
        %v1272 = vadd.f32 %v1152, %v1271
        %v1273 = vpop.f32.mrb[0].mxu0
        %1274 = vmatprep.mubr.bf16.mxu0 0
        %1275 = vmatmul.mubr.bf16.gmra.mrb[0].mxu0 %v1120
        %v1276 = vpop.f32.mrb[0].mxu0
        %v1277 = vadd.f32 %v1152, %v1276
        %v1278 = vpop.f32.mrb[0].mxu0
        %v1279 = vpop.f32.mrb[0].mxu0
        %v1280 = vadd.f32 %v1152, %v1279
        %v1281 = vpop.f32.mrb[0].mxu0
        %1282 = vmatprep.mubr.bf16.mxu0 0
        %1283 = vmatmul.mubr.bf16.gmra.mrb[0].mxu0 %v1121
        %v1284 = vpop.f32.mrb[0].mxu0
        %v1285 = vadd.f32 %v1152, %v1284
        %v1286 = vpop.f32.mrb[0].mxu0
        %v1287 = vpop.f32.mrb[0].mxu0
        %v1288 = vadd.f32 %v1152, %v1287
        %v1289 = vpop.f32.mrb[0].mxu0
        %1290 = vmatprep.mubr.bf16.mxu0 0
        %1291 = vmatmul.mubr.bf16.gmra.mrb[0].mxu0 %v1122
        %v1292 = vpop.f32.mrb[0].mxu0
        %v1293 = vadd.f32 %v1152, %v1292
        %v1294 = vpop.f32.mrb[0].mxu0
        %v1295 = vpop.f32.mrb[0].mxu0
        %v1296 = vadd.f32 %v1152, %v1295
        %v1297 = vpop.f32.mrb[0].mxu0
        %1298 = vmatprep.mubr.bf16.mxu0 0
        %1299 = vmatmul.mubr.bf16.gmra.mrb[0].mxu0 %v1123
        %v1300 = vpop.f32.mrb[0].mxu0
        %v1301 = vadd.f32 %v1152, %v1300
        %v1302 = vpop.f32.mrb[0].mxu0
        %v1303 = vpop.f32.mrb[0].mxu0
        %v1304 = vadd.f32 %v1152, %v1303
        %v1305 = vpop.f32.mrb[0].mxu0
        %1306 = vmatprep.mubr.bf16.mxu0 0
        %1307 = vmatmul.mubr.bf16.gmra.mrb[0].mxu0 %v1124
        %v1308 = vpop.f32.mrb[0].mxu0
        %v1309 = vadd.f32 %v1152, %v1308
        %v1310 = vpop.f32.mrb[0].mxu0
        %v1311 = vpop.f32.mrb[0].mxu0
        %v1312 = vadd.f32 %v1152, %v1311
        %v1313 = vpop.f32.mrb[0].mxu0
        %1314 = vmatprep.mubr.bf16.mxu0 0
        %1315 = vmatmul.mubr.bf16.gmra.mrb[0].mxu0 %v1125
        %v1316 = vpop.f32.mrb[0].mxu0
        %v1317 = vadd.f32 %v1152, %v1316
        %v1318 = vpop.f32.mrb[0].mxu0
        %v1319 = vpop.f32.mrb[0].mxu0
        %v1320 = vadd.f32 %v1152, %v1319
        %v1321 = vpop.f32.mrb[0].mxu0
        %1322 = vmatprep.mubr.bf16.mxu0 0
        %1323 = vmatmul.mubr.bf16.gmra.mrb[0].mxu0 %v1126
        %v1324 = vpop.f32.mrb[0].mxu0
        %v1325 = vadd.f32 %v1152, %v1324
        %v1326 = vpop.f32.mrb[0].mxu0
        %v1327 = vpop.f32.mrb[0].mxu0
        %v1328 = vadd.f32 %v1152, %v1327
        %v1329 = vpop.f32.mrb[0].mxu0
        %1330 = vmatprep.mubr.bf16.mxu0 0
        %1331 = vmatmul.mubr.bf16.gmra.mrb[0].mxu0 %v1127
        %v1332 = vpop.f32.mrb[0].mxu0
        %v1333 = vadd.f32 %v1152, %v1332
        %v1334 = vpop.f32.mrb[0].mxu0
        %v1335 = vpop.f32.mrb[0].mxu0
        %v1336 = vadd.f32 %v1152, %v1335
        %v1337 = vpop.f32.mrb[0].mxu0
        %1338 = vmatprep.mubr.bf16.mxu0 0
        %1339 = vmatmul.mubr.bf16.gmra.mrb[0].mxu0 %v1128
        %v1340 = vpop.f32.mrb[0].mxu0
        %v1341 = vadd.f32 %v1152, %v1340
        %v1342 = vpop.f32.mrb[0].mxu0
        %v1343 = vpop.f32.mrb[0].mxu0
        %v1344 = vadd.f32 %v1152, %v1343
        %v1345 = vpop.f32.mrb[0].mxu0
        %1346 = vmatprep.mubr.bf16.mxu0 0
        %1347 = vmatmul.mubr.bf16.gmra.mrb[0].mxu0 %v1129
        %v1348 = vpop.f32.mrb[0].mxu0
        %v1349 = vadd.f32 %v1152, %v1348
        %v1350 = vpop.f32.mrb[0].mxu0
        %v1351 = vpop.f32.mrb[0].mxu0
        %v1352 = vadd.f32 %v1152, %v1351
        %v1353 = vpop.f32.mrb[0].mxu0
        %1354 = vmatprep.mubr.bf16.mxu0 0
        %1355 = vmatmul.mubr.bf16.gmra.mrb[0].mxu0 %v1130
        %v1356 = vpop.f32.mrb[0].mxu0
        %v1357 = vadd.f32 %v1152, %v1356
        %v1358 = vpop.f32.mrb[0].mxu0
        %v1359 = vpop.f32.mrb[0].mxu0
        %v1360 = vadd.f32 %v1152, %v1359
        %v1361 = vpop.f32.mrb[0].mxu0
        %1362 = vdwg.mxu0
        %v1363 = vmax.f32 %v1237, 0.0
        %v1364 = vmax.f32 %v1240, 0.0
        %v1365 = vmax.f32 %v1245, 0.0
        %v1366 = vmax.f32 %v1248, 0.0
        %v1367 = vmax.f32 %v1253, 0.0
        %v1368 = vmax.f32 %v1256, 0.0
        %v1369 = vmax.f32 %v1261, 0.0
        %v1370 = vmax.f32 %v1264, 0.0
        %v1371 = vmax.f32 %v1269, 0.0
        %v1372 = vmax.f32 %v1272, 0.0
        %v1373 = vmax.f32 %v1277, 0.0
        %v1374 = vmax.f32 %v1280, 0.0
        %v1375 = vmax.f32 %v1285, 0.0
        %v1376 = vmax.f32 %v1288, 0.0
        %v1377 = vmax.f32 %v1293, 0.0
        %v1378 = vmax.f32 %v1296, 0.0
        %v1379 = vmax.f32 %v1301, 0.0
        %v1380 = vmax.f32 %v1304, 0.0
        %v1381 = vmax.f32 %v1309, 0.0
        %v1382 = vmax.f32 %v1312, 0.0
        %v1383 = vmax.f32 %v1317, 0.0
        %v1384 = vmax.f32 %v1320, 0.0
        %v1385 = vmax.f32 %v1325, 0.0
        %v1386 = vmax.f32 %v1328, 0.0
        %v1387 = vmax.f32 %v1333, 0.0
        %v1388 = vmax.f32 %v1336, 0.0
        %v1389 = vmax.f32 %v1341, 0.0
        %v1390 = vmax.f32 %v1344, 0.0
        %v1391 = vmax.f32 %v1349, 0.0
        %v1392 = vmax.f32 %v1352, 0.0
        %v1393 = vmax.f32 %v1357, 0.0
        %v1394 = vmax.f32 %v1360, 0.0
        %v1395 = vpack.c.bf16 %v1364, %v1363
        %v1396 = vpack.c.bf16 %v1366, %v1365
        %v1397 = vpack.c.bf16 %v1368, %v1367
        %v1398 = vpack.c.bf16 %v1370, %v1369
        %v1399 = vpack.c.bf16 %v1372, %v1371
        %v1400 = vpack.c.bf16 %v1374, %v1373
        %v1401 = vpack.c.bf16 %v1376, %v1375
        %v1402 = vpack.c.bf16 %v1378, %v1377
        %v1403 = vpack.c.bf16 %v1380, %v1379
        %v1404 = vpack.c.bf16 %v1382, %v1381
        %v1405 = vpack.c.bf16 %v1384, %v1383
        %v1406 = vpack.c.bf16 %v1386, %v1385
        %v1407 = vpack.c.bf16 %v1388, %v1387
        %v1408 = vpack.c.bf16 %v1390, %v1389
        %v1409 = vpack.c.bf16 %v1392, %v1391
        %v1410 = vpack.c.bf16 %v1394, %v1393
        %v1411 = vld [vmem:[%s7] sm:$0xf]
        %v1412 = vld [vmem:[%s7 + $0x4] sm:$0xf]
        %v1413 = vld [vmem:[%s7 + $0x8] sm:$0xf]
        %v1414 = vld [vmem:[%s7 + $0xc] sm:$0xf]
        %v1415 = vld [vmem:[%s7 + $0x10] sm:$0xf]
        %v1416 = vld [vmem:[%s7 + $0x14] sm:$0xf]
        %v1417 = vld [vmem:[%s7 + $0x18] sm:$0xf]
        %v1418 = vld [vmem:[%s7 + $0x1c] sm:$0xf]
        %v1419 = vld [vmem:[%s7 + $0x20] sm:$0xf]
        %v1420 = vld [vmem:[%s7 + $0x24] sm:$0xf]
        %v1421 = vld [vmem:[%s7 + $0x28] sm:$0xf]
        %v1422 = vld [vmem:[%s7 + $0x2c] sm:$0xf]
        %v1423 = vld [vmem:[%s7 + $0x30] sm:$0xf]
        %v1424 = vld [vmem:[%s7 + $0x34] sm:$0xf]
        %v1425 = vld [vmem:[%s7 + $0x38] sm:$0xf]
        %v1426 = vld [vmem:[%s7 + $0x3c] sm:$0xf]
        %v1427 = vld [vmem:[%s8] sm:$0x1]
        %v1429 = vlaneseq
        %v1430 = vshrl.u32 %v1429, 7
        %v1431 = vsub.s32 0, %v1430
        %v1432 = vrot.slane %v1427, %v1431
        %v1450 = vunpack.c.l.b16 %v1411
        %v1451 = vunpack.c.l.b16 %v1412
        %v1452 = vunpack.c.l.b16 %v1413
        %v1453 = vunpack.c.l.b16 %v1414
        %v1454 = vunpack.c.l.b16 %v1415
        %v1455 = vunpack.c.l.b16 %v1416
        %v1456 = vunpack.c.l.b16 %v1417
        %v1457 = vunpack.c.l.b16 %v1418
        %v1458 = vunpack.c.l.b16 %v1419
        %v1459 = vunpack.c.l.b16 %v1420
        %v1460 = vunpack.c.l.b16 %v1421
        %v1461 = vunpack.c.l.b16 %v1422
        %v1462 = vunpack.c.l.b16 %v1423
        %v1463 = vunpack.c.l.b16 %v1424
        %v1464 = vunpack.c.l.b16 %v1425
        %v1465 = vunpack.c.l.b16 %v1426
        %v1466 = vpack.c.b16 %v1451, %v1450
        %v1467 = vpack.c.b16 %v1453, %v1452
        %v1468 = vpack.c.b16 %v1455, %v1454
        %v1469 = vpack.c.b16 %v1457, %v1456
        %v1470 = vpack.c.b16 %v1459, %v1458
        %v1471 = vpack.c.b16 %v1461, %v1460
        %v1472 = vpack.c.b16 %v1463, %v1462
        %v1473 = vpack.c.b16 %v1465, %v1464
        %1482 = vmatprep.subr.bf16.mxu0 0
        %1483 = vmatpush1.bf16.msra.mxu0 %v1466
        %1484 = vmatprep.subr.bf16.mxu0 0
        %1485 = vmatpush1.bf16.msra.mxu0 %v1467
        %1486 = vmatprep.subr.bf16.mxu0 0
        %1487 = vmatpush1.bf16.msra.mxu0 %v1468
        %1488 = vmatprep.subr.bf16.mxu0 0
        %1489 = vmatpush1.bf16.msra.mxu0 %v1469
        %1490 = vmatprep.subr.bf16.mxu0 0
        %1491 = vmatpush1.bf16.msra.mxu0 %v1470
        %1492 = vmatprep.subr.bf16.mxu0 0
        %1493 = vmatpush1.bf16.msra.mxu0 %v1471
        %1494 = vmatprep.subr.bf16.mxu0 0
        %1495 = vmatpush1.bf16.msra.mxu0 %v1472
        %1496 = vmatprep.subr.bf16.mxu0 0
        %1497 = vmatpush1.bf16.msra.mxu0 %v1473
        %1498 = vmatprep.subr.bf16.mxu0 0
        %1499 = vmatpush1.bf16.msra.mxu0 0
        %1500 = vmatprep.subr.bf16.mxu0 0
        %1501 = vmatpush1.bf16.msra.mxu0 0
        %1502 = vmatprep.subr.bf16.mxu0 0
        %1503 = vmatpush1.bf16.msra.mxu0 0
        %1504 = vmatprep.subr.bf16.mxu0 0
        %1505 = vmatpush1.bf16.msra.mxu0 0
        %1506 = vmatprep.subr.bf16.mxu0 0
        %1507 = vmatpush1.bf16.msra.mxu0 0
        %1508 = vmatprep.subr.bf16.mxu0 0
        %1509 = vmatpush1.bf16.msra.mxu0 0
        %1510 = vmatprep.subr.bf16.mxu0 0
        %1511 = vmatpush1.bf16.msra.mxu0 0
        %1512 = vmatprep.subr.bf16.mxu0 0
        %1513 = vmatpush1.bf16.msra.mxu0 0
        %1514 = vmatprep.mubr.bf16.mxu0 0
        %1515 = vmatmul.mubr.bf16.gmra.mrb[0].mxu0 %v1395
        %v1516 = vpop.f32.mrb[0].mxu0
        %v1517 = vadd.f32 %v1432, %v1516
        %v1518 = vpop.f32.mrb[0].mxu0
        %v1519 = vpop.f32.mrb[0].mxu0
        %v1520 = vadd.f32 %v1432, %v1519
        %v1521 = vpop.f32.mrb[0].mxu0
        %1522 = vmatprep.mubr.bf16.mxu0 0
        %1523 = vmatmul.mubr.bf16.gmra.mrb[0].mxu0 %v1396
        %v1524 = vpop.f32.mrb[0].mxu0
        %v1525 = vadd.f32 %v1432, %v1524
        %v1526 = vpop.f32.mrb[0].mxu0
        %v1527 = vpop.f32.mrb[0].mxu0
        %v1528 = vadd.f32 %v1432, %v1527
        %v1529 = vpop.f32.mrb[0].mxu0
        %1530 = vmatprep.mubr.bf16.mxu0 0
        %1531 = vmatmul.mubr.bf16.gmra.mrb[0].mxu0 %v1397
        %v1532 = vpop.f32.mrb[0].mxu0
        %v1533 = vadd.f32 %v1432, %v1532
        %v1534 = vpop.f32.mrb[0].mxu0
        %v1535 = vpop.f32.mrb[0].mxu0
        %v1536 = vadd.f32 %v1432, %v1535
        %v1537 = vpop.f32.mrb[0].mxu0
        %1538 = vmatprep.mubr.bf16.mxu0 0
        %1539 = vmatmul.mubr.bf16.gmra.mrb[0].mxu0 %v1398
        %v1540 = vpop.f32.mrb[0].mxu0
        %v1541 = vadd.f32 %v1432, %v1540
        %v1542 = vpop.f32.mrb[0].mxu0
        %v1543 = vpop.f32.mrb[0].mxu0
        %v1544 = vadd.f32 %v1432, %v1543
        %v1545 = vpop.f32.mrb[0].mxu0
        %1546 = vmatprep.mubr.bf16.mxu0 0
        %1547 = vmatmul.mubr.bf16.gmra.mrb[0].mxu0 %v1399
        %v1548 = vpop.f32.mrb[0].mxu0
        %v1549 = vadd.f32 %v1432, %v1548
        %v1550 = vpop.f32.mrb[0].mxu0
        %v1551 = vpop.f32.mrb[0].mxu0
        %v1552 = vadd.f32 %v1432, %v1551
        %v1553 = vpop.f32.mrb[0].mxu0
        %1554 = vmatprep.mubr.bf16.mxu0 0
        %1555 = vmatmul.mubr.bf16.gmra.mrb[0].mxu0 %v1400
        %v1556 = vpop.f32.mrb[0].mxu0
        %v1557 = vadd.f32 %v1432, %v1556
        %v1558 = vpop.f32.mrb[0].mxu0
        %v1559 = vpop.f32.mrb[0].mxu0
        %v1560 = vadd.f32 %v1432, %v1559
        %v1561 = vpop.f32.mrb[0].mxu0
        %1562 = vmatprep.mubr.bf16.mxu0 0
        %1563 = vmatmul.mubr.bf16.gmra.mrb[0].mxu0 %v1401
        %v1564 = vpop.f32.mrb[0].mxu0
        %v1565 = vadd.f32 %v1432, %v1564
        %v1566 = vpop.f32.mrb[0].mxu0
        %v1567 = vpop.f32.mrb[0].mxu0
        %v1568 = vadd.f32 %v1432, %v1567
        %v1569 = vpop.f32.mrb[0].mxu0
        %1570 = vmatprep.mubr.bf16.mxu0 0
        %1571 = vmatmul.mubr.bf16.gmra.mrb[0].mxu0 %v1402
        %v1572 = vpop.f32.mrb[0].mxu0
        %v1573 = vadd.f32 %v1432, %v1572
        %v1574 = vpop.f32.mrb[0].mxu0
        %v1575 = vpop.f32.mrb[0].mxu0
        %v1576 = vadd.f32 %v1432, %v1575
        %v1577 = vpop.f32.mrb[0].mxu0
        %1578 = vmatprep.mubr.bf16.mxu0 0
        %1579 = vmatmul.mubr.bf16.gmra.mrb[0].mxu0 %v1403
        %v1580 = vpop.f32.mrb[0].mxu0
        %v1581 = vadd.f32 %v1432, %v1580
        %v1582 = vpop.f32.mrb[0].mxu0
        %v1583 = vpop.f32.mrb[0].mxu0
        %v1584 = vadd.f32 %v1432, %v1583
        %v1585 = vpop.f32.mrb[0].mxu0
        %1586 = vmatprep.mubr.bf16.mxu0 0
        %1587 = vmatmul.mubr.bf16.gmra.mrb[0].mxu0 %v1404
        %v1588 = vpop.f32.mrb[0].mxu0
        %v1589 = vadd.f32 %v1432, %v1588
        %v1590 = vpop.f32.mrb[0].mxu0
        %v1591 = vpop.f32.mrb[0].mxu0
        %v1592 = vadd.f32 %v1432, %v1591
        %v1593 = vpop.f32.mrb[0].mxu0
        %1594 = vmatprep.mubr.bf16.mxu0 0
        %1595 = vmatmul.mubr.bf16.gmra.mrb[0].mxu0 %v1405
        %v1596 = vpop.f32.mrb[0].mxu0
        %v1597 = vadd.f32 %v1432, %v1596
        %v1598 = vpop.f32.mrb[0].mxu0
        %v1599 = vpop.f32.mrb[0].mxu0
        %v1600 = vadd.f32 %v1432, %v1599
        %v1601 = vpop.f32.mrb[0].mxu0
        %1602 = vmatprep.mubr.bf16.mxu0 0
        %1603 = vmatmul.mubr.bf16.gmra.mrb[0].mxu0 %v1406
        %v1604 = vpop.f32.mrb[0].mxu0
        %v1605 = vadd.f32 %v1432, %v1604
        %v1606 = vpop.f32.mrb[0].mxu0
        %v1607 = vpop.f32.mrb[0].mxu0
        %v1608 = vadd.f32 %v1432, %v1607
        %v1609 = vpop.f32.mrb[0].mxu0
        %1610 = vmatprep.mubr.bf16.mxu0 0
        %1611 = vmatmul.mubr.bf16.gmra.mrb[0].mxu0 %v1407
        %v1612 = vpop.f32.mrb[0].mxu0
        %v1613 = vadd.f32 %v1432, %v1612
        %v1614 = vpop.f32.mrb[0].mxu0
        %v1615 = vpop.f32.mrb[0].mxu0
        %v1616 = vadd.f32 %v1432, %v1615
        %v1617 = vpop.f32.mrb[0].mxu0
        %1618 = vmatprep.mubr.bf16.mxu0 0
        %1619 = vmatmul.mubr.bf16.gmra.mrb[0].mxu0 %v1408
        %v1620 = vpop.f32.mrb[0].mxu0
        %v1621 = vadd.f32 %v1432, %v1620
        %v1622 = vpop.f32.mrb[0].mxu0
        %v1623 = vpop.f32.mrb[0].mxu0
        %v1624 = vadd.f32 %v1432, %v1623
        %v1625 = vpop.f32.mrb[0].mxu0
        %1626 = vmatprep.mubr.bf16.mxu0 0
        %1627 = vmatmul.mubr.bf16.gmra.mrb[0].mxu0 %v1409
        %v1628 = vpop.f32.mrb[0].mxu0
        %v1629 = vadd.f32 %v1432, %v1628
        %v1630 = vpop.f32.mrb[0].mxu0
        %v1631 = vpop.f32.mrb[0].mxu0
        %v1632 = vadd.f32 %v1432, %v1631
        %v1633 = vpop.f32.mrb[0].mxu0
        %1634 = vmatprep.mubr.bf16.mxu0 0
        %1635 = vmatmul.mubr.bf16.gmra.mrb[0].mxu0 %v1410
        %v1636 = vpop.f32.mrb[0].mxu0
        %v1637 = vadd.f32 %v1432, %v1636
        %v1638 = vpop.f32.mrb[0].mxu0
        %v1639 = vpop.f32.mrb[0].mxu0
        %v1640 = vadd.f32 %v1432, %v1639
        %v1641 = vpop.f32.mrb[0].mxu0
        %1642 = vdwg.mxu0
        %v1643 = vmax.f32 %v1517, 0.0
        %v1644 = vmax.f32 %v1520, 0.0
        %v1645 = vmax.f32 %v1525, 0.0
        %v1646 = vmax.f32 %v1528, 0.0
        %v1647 = vmax.f32 %v1533, 0.0
        %v1648 = vmax.f32 %v1536, 0.0
        %v1649 = vmax.f32 %v1541, 0.0
        %v1650 = vmax.f32 %v1544, 0.0
        %v1651 = vmax.f32 %v1549, 0.0
        %v1652 = vmax.f32 %v1552, 0.0
        %v1653 = vmax.f32 %v1557, 0.0
        %v1654 = vmax.f32 %v1560, 0.0
        %v1655 = vmax.f32 %v1565, 0.0
        %v1656 = vmax.f32 %v1568, 0.0
        %v1657 = vmax.f32 %v1573, 0.0
        %v1658 = vmax.f32 %v1576, 0.0
        %v1659 = vmax.f32 %v1581, 0.0
        %v1660 = vmax.f32 %v1584, 0.0
        %v1661 = vmax.f32 %v1589, 0.0
        %v1662 = vmax.f32 %v1592, 0.0
        %v1663 = vmax.f32 %v1597, 0.0
        %v1664 = vmax.f32 %v1600, 0.0
        %v1665 = vmax.f32 %v1605, 0.0
        %v1666 = vmax.f32 %v1608, 0.0
        %v1667 = vmax.f32 %v1613, 0.0
        %v1668 = vmax.f32 %v1616, 0.0
        %v1669 = vmax.f32 %v1621, 0.0
        %v1670 = vmax.f32 %v1624, 0.0
        %v1671 = vmax.f32 %v1629, 0.0
        %v1672 = vmax.f32 %v1632, 0.0
        %v1673 = vmax.f32 %v1637, 0.0
        %v1674 = vmax.f32 %v1640, 0.0
        %v1675 = vpack.c.bf16 %v1644, %v1643
        %v1676 = vpack.c.bf16 %v1646, %v1645
        %v1677 = vpack.c.bf16 %v1648, %v1647
        %v1678 = vpack.c.bf16 %v1650, %v1649
        %v1679 = vpack.c.bf16 %v1652, %v1651
        %v1680 = vpack.c.bf16 %v1654, %v1653
        %v1681 = vpack.c.bf16 %v1656, %v1655
        %v1682 = vpack.c.bf16 %v1658, %v1657
        %v1683 = vpack.c.bf16 %v1660, %v1659
        %v1684 = vpack.c.bf16 %v1662, %v1661
        %v1685 = vpack.c.bf16 %v1664, %v1663
        %v1686 = vpack.c.bf16 %v1666, %v1665
        %v1687 = vpack.c.bf16 %v1668, %v1667
        %v1688 = vpack.c.bf16 %v1670, %v1669
        %v1689 = vpack.c.bf16 %v1672, %v1671
        %v1690 = vpack.c.bf16 %v1674, %v1673
        %v1691 = vld [vmem:[%s9] sm:$0xf]
        %v1692 = vld [vmem:[%s9 + $0x4] sm:$0xf]
        %v1693 = vld [vmem:[%s9 + $0x8] sm:$0xf]
        %v1694 = vld [vmem:[%s9 + $0xc] sm:$0xf]
        %v1695 = vld [vmem:[%s9 + $0x10] sm:$0xf]
        %v1696 = vld [vmem:[%s9 + $0x14] sm:$0xf]
        %v1697 = vld [vmem:[%s9 + $0x18] sm:$0xf]
        %v1698 = vld [vmem:[%s9 + $0x1c] sm:$0xf]
        %v1699 = vld [vmem:[%s9 + $0x20] sm:$0xf]
        %v1700 = vld [vmem:[%s9 + $0x24] sm:$0xf]
        %v1701 = vld [vmem:[%s9 + $0x28] sm:$0xf]
        %v1702 = vld [vmem:[%s9 + $0x2c] sm:$0xf]
        %v1703 = vld [vmem:[%s9 + $0x30] sm:$0xf]
        %v1704 = vld [vmem:[%s9 + $0x34] sm:$0xf]
        %v1705 = vld [vmem:[%s9 + $0x38] sm:$0xf]
        %v1706 = vld [vmem:[%s9 + $0x3c] sm:$0xf]
        %v1707 = vld [vmem:[%s10] sm:$0x1]
        %v1709 = vlaneseq
        %v1710 = vshrl.u32 %v1709, 7
        %v1711 = vsub.s32 0, %v1710
        %v1712 = vrot.slane %v1707, %v1711
        %v1730 = vunpack.c.l.b16 %v1691
        %v1731 = vunpack.c.l.b16 %v1692
        %v1732 = vunpack.c.l.b16 %v1693
        %v1733 = vunpack.c.l.b16 %v1694
        %v1734 = vunpack.c.l.b16 %v1695
        %v1735 = vunpack.c.l.b16 %v1696
        %v1736 = vunpack.c.l.b16 %v1697
        %v1737 = vunpack.c.l.b16 %v1698
        %v1738 = vunpack.c.l.b16 %v1699
        %v1739 = vunpack.c.l.b16 %v1700
        %v1740 = vunpack.c.l.b16 %v1701
        %v1741 = vunpack.c.l.b16 %v1702
        %v1742 = vunpack.c.l.b16 %v1703
        %v1743 = vunpack.c.l.b16 %v1704
        %v1744 = vunpack.c.l.b16 %v1705
        %v1745 = vunpack.c.l.b16 %v1706
        %v1746 = vpack.c.b16 %v1731, %v1730
        %v1747 = vpack.c.b16 %v1733, %v1732
        %v1748 = vpack.c.b16 %v1735, %v1734
        %v1749 = vpack.c.b16 %v1737, %v1736
        %v1750 = vpack.c.b16 %v1739, %v1738
        %v1751 = vpack.c.b16 %v1741, %v1740
        %v1752 = vpack.c.b16 %v1743, %v1742
        %v1753 = vpack.c.b16 %v1745, %v1744
        %1762 = vmatprep.subr.bf16.mxu0 0
        %1763 = vmatpush1.bf16.msra.mxu0 %v1746
        %1764 = vmatprep.subr.bf16.mxu0 0
        %1765 = vmatpush1.bf16.msra.mxu0 %v1747
        %1766 = vmatprep.subr.bf16.mxu0 0
        %1767 = vmatpush1.bf16.msra.mxu0 %v1748
        %1768 = vmatprep.subr.bf16.mxu0 0
        %1769 = vmatpush1.bf16.msra.mxu0 %v1749
        %1770 = vmatprep.subr.bf16.mxu0 0
        %1771 = vmatpush1.bf16.msra.mxu0 %v1750
        %1772 = vmatprep.subr.bf16.mxu0 0
        %1773 = vmatpush1.bf16.msra.mxu0 %v1751
        %1774 = vmatprep.subr.bf16.mxu0 0
        %1775 = vmatpush1.bf16.msra.mxu0 %v1752
        %1776 = vmatprep.subr.bf16.mxu0 0
        %1777 = vmatpush1.bf16.msra.mxu0 %v1753
        %1778 = vmatprep.subr.bf16.mxu0 0
        %1779 = vmatpush1.bf16.msra.mxu0 0
        %1780 = vmatprep.subr.bf16.mxu0 0
        %1781 = vmatpush1.bf16.msra.mxu0 0
        %1782 = vmatprep.subr.bf16.mxu0 0
        %1783 = vmatpush1.bf16.msra.mxu0 0
        %1784 = vmatprep.subr.bf16.mxu0 0
        %1785 = vmatpush1.bf16.msra.mxu0 0
        %1786 = vmatprep.subr.bf16.mxu0 0
        %1787 = vmatpush1.bf16.msra.mxu0 0
        %1788 = vmatprep.subr.bf16.mxu0 0
        %1789 = vmatpush1.bf16.msra.mxu0 0
        %1790 = vmatprep.subr.bf16.mxu0 0
        %1791 = vmatpush1.bf16.msra.mxu0 0
        %1792 = vmatprep.subr.bf16.mxu0 0
        %1793 = vmatpush1.bf16.msra.mxu0 0
        %1794 = vmatprep.mubr.bf16.mxu0 0
        %1795 = vmatmul.mubr.bf16.gmra.mrb[0].mxu0 %v1675
        %v1796 = vpop.f32.mrb[0].mxu0
        %v1797 = vadd.f32 %v1712, %v1796
        %v1798 = vpop.f32.mrb[0].mxu0
        %v1799 = vpop.f32.mrb[0].mxu0
        %v1800 = vadd.f32 %v1712, %v1799
        %v1801 = vpop.f32.mrb[0].mxu0
        %1802 = vmatprep.mubr.bf16.mxu0 0
        %1803 = vmatmul.mubr.bf16.gmra.mrb[0].mxu0 %v1676
        %v1804 = vpop.f32.mrb[0].mxu0
        %v1805 = vadd.f32 %v1712, %v1804
        %v1806 = vpop.f32.mrb[0].mxu0
        %v1807 = vpop.f32.mrb[0].mxu0
        %v1808 = vadd.f32 %v1712, %v1807
        %v1809 = vpop.f32.mrb[0].mxu0
        %1810 = vmatprep.mubr.bf16.mxu0 0
        %1811 = vmatmul.mubr.bf16.gmra.mrb[0].mxu0 %v1677
        %v1812 = vpop.f32.mrb[0].mxu0
        %v1813 = vadd.f32 %v1712, %v1812
        %v1814 = vpop.f32.mrb[0].mxu0
        %v1815 = vpop.f32.mrb[0].mxu0
        %v1816 = vadd.f32 %v1712, %v1815
        %v1817 = vpop.f32.mrb[0].mxu0
        %1818 = vmatprep.mubr.bf16.mxu0 0
        %1819 = vmatmul.mubr.bf16.gmra.mrb[0].mxu0 %v1678
        %v1820 = vpop.f32.mrb[0].mxu0
        %v1821 = vadd.f32 %v1712, %v1820
        %v1822 = vpop.f32.mrb[0].mxu0
        %v1823 = vpop.f32.mrb[0].mxu0
        %v1824 = vadd.f32 %v1712, %v1823
        %v1825 = vpop.f32.mrb[0].mxu0
        %1826 = vmatprep.mubr.bf16.mxu0 0
        %1827 = vmatmul.mubr.bf16.gmra.mrb[0].mxu0 %v1679
        %v1828 = vpop.f32.mrb[0].mxu0
        %v1829 = vadd.f32 %v1712, %v1828
        %v1830 = vpop.f32.mrb[0].mxu0
        %v1831 = vpop.f32.mrb[0].mxu0
        %v1832 = vadd.f32 %v1712, %v1831
        %v1833 = vpop.f32.mrb[0].mxu0
        %1834 = vmatprep.mubr.bf16.mxu0 0
        %1835 = vmatmul.mubr.bf16.gmra.mrb[0].mxu0 %v1680
        %v1836 = vpop.f32.mrb[0].mxu0
        %v1837 = vadd.f32 %v1712, %v1836
        %v1838 = vpop.f32.mrb[0].mxu0
        %v1839 = vpop.f32.mrb[0].mxu0
        %v1840 = vadd.f32 %v1712, %v1839
        %v1841 = vpop.f32.mrb[0].mxu0
        %1842 = vmatprep.mubr.bf16.mxu0 0
        %1843 = vmatmul.mubr.bf16.gmra.mrb[0].mxu0 %v1681
        %v1844 = vpop.f32.mrb[0].mxu0
        %v1845 = vadd.f32 %v1712, %v1844
        %v1846 = vpop.f32.mrb[0].mxu0
        %v1847 = vpop.f32.mrb[0].mxu0
        %v1848 = vadd.f32 %v1712, %v1847
        %v1849 = vpop.f32.mrb[0].mxu0
        %1850 = vmatprep.mubr.bf16.mxu0 0
        %1851 = vmatmul.mubr.bf16.gmra.mrb[0].mxu0 %v1682
        %v1852 = vpop.f32.mrb[0].mxu0
        %v1853 = vadd.f32 %v1712, %v1852
        %v1854 = vpop.f32.mrb[0].mxu0
        %v1855 = vpop.f32.mrb[0].mxu0
        %v1856 = vadd.f32 %v1712, %v1855
        %v1857 = vpop.f32.mrb[0].mxu0
        %1858 = vmatprep.mubr.bf16.mxu0 0
        %1859 = vmatmul.mubr.bf16.gmra.mrb[0].mxu0 %v1683
        %v1860 = vpop.f32.mrb[0].mxu0
        %v1861 = vadd.f32 %v1712, %v1860
        %v1862 = vpop.f32.mrb[0].mxu0
        %v1863 = vpop.f32.mrb[0].mxu0
        %v1864 = vadd.f32 %v1712, %v1863
        %v1865 = vpop.f32.mrb[0].mxu0
        %1866 = vmatprep.mubr.bf16.mxu0 0
        %1867 = vmatmul.mubr.bf16.gmra.mrb[0].mxu0 %v1684
        %v1868 = vpop.f32.mrb[0].mxu0
        %v1869 = vadd.f32 %v1712, %v1868
        %v1870 = vpop.f32.mrb[0].mxu0
        %v1871 = vpop.f32.mrb[0].mxu0
        %v1872 = vadd.f32 %v1712, %v1871
        %v1873 = vpop.f32.mrb[0].mxu0
        %1874 = vmatprep.mubr.bf16.mxu0 0
        %1875 = vmatmul.mubr.bf16.gmra.mrb[0].mxu0 %v1685
        %v1876 = vpop.f32.mrb[0].mxu0
        %v1877 = vadd.f32 %v1712, %v1876
        %v1878 = vpop.f32.mrb[0].mxu0
        %v1879 = vpop.f32.mrb[0].mxu0
        %v1880 = vadd.f32 %v1712, %v1879
        %v1881 = vpop.f32.mrb[0].mxu0
        %1882 = vmatprep.mubr.bf16.mxu0 0
        %1883 = vmatmul.mubr.bf16.gmra.mrb[0].mxu0 %v1686
        %v1884 = vpop.f32.mrb[0].mxu0
        %v1885 = vadd.f32 %v1712, %v1884
        %v1886 = vpop.f32.mrb[0].mxu0
        %v1887 = vpop.f32.mrb[0].mxu0
        %v1888 = vadd.f32 %v1712, %v1887
        %v1889 = vpop.f32.mrb[0].mxu0
        %1890 = vmatprep.mubr.bf16.mxu0 0
        %1891 = vmatmul.mubr.bf16.gmra.mrb[0].mxu0 %v1687
        %v1892 = vpop.f32.mrb[0].mxu0
        %v1893 = vadd.f32 %v1712, %v1892
        %v1894 = vpop.f32.mrb[0].mxu0
        %v1895 = vpop.f32.mrb[0].mxu0
        %v1896 = vadd.f32 %v1712, %v1895
        %v1897 = vpop.f32.mrb[0].mxu0
        %1898 = vmatprep.mubr.bf16.mxu0 0
        %1899 = vmatmul.mubr.bf16.gmra.mrb[0].mxu0 %v1688
        %v1900 = vpop.f32.mrb[0].mxu0
        %v1901 = vadd.f32 %v1712, %v1900
        %v1902 = vpop.f32.mrb[0].mxu0
        %v1903 = vpop.f32.mrb[0].mxu0
        %v1904 = vadd.f32 %v1712, %v1903
        %v1905 = vpop.f32.mrb[0].mxu0
        %1906 = vmatprep.mubr.bf16.mxu0 0
        %1907 = vmatmul.mubr.bf16.gmra.mrb[0].mxu0 %v1689
        %v1908 = vpop.f32.mrb[0].mxu0
        %v1909 = vadd.f32 %v1712, %v1908
        %v1910 = vpop.f32.mrb[0].mxu0
        %v1911 = vpop.f32.mrb[0].mxu0
        %v1912 = vadd.f32 %v1712, %v1911
        %v1913 = vpop.f32.mrb[0].mxu0
        %1914 = vmatprep.mubr.bf16.mxu0 0
        %1915 = vmatmul.mubr.bf16.gmra.mrb[0].mxu0 %v1690
        %v1916 = vpop.f32.mrb[0].mxu0
        %v1917 = vadd.f32 %v1712, %v1916
        %v1918 = vpop.f32.mrb[0].mxu0
        %v1919 = vpop.f32.mrb[0].mxu0
        %v1920 = vadd.f32 %v1712, %v1919
        %v1921 = vpop.f32.mrb[0].mxu0
        %1922 = vdwg.mxu0
        %v1923 = vmax.f32 %v1797, 0.0
        %v1924 = vmax.f32 %v1800, 0.0
        %v1925 = vmax.f32 %v1805, 0.0
        %v1926 = vmax.f32 %v1808, 0.0
        %v1927 = vmax.f32 %v1813, 0.0
        %v1928 = vmax.f32 %v1816, 0.0
        %v1929 = vmax.f32 %v1821, 0.0
        %v1930 = vmax.f32 %v1824, 0.0
        %v1931 = vmax.f32 %v1829, 0.0
        %v1932 = vmax.f32 %v1832, 0.0
        %v1933 = vmax.f32 %v1837, 0.0
        %v1934 = vmax.f32 %v1840, 0.0
        %v1935 = vmax.f32 %v1845, 0.0
        %v1936 = vmax.f32 %v1848, 0.0
        %v1937 = vmax.f32 %v1853, 0.0
        %v1938 = vmax.f32 %v1856, 0.0
        %v1939 = vmax.f32 %v1861, 0.0
        %v1940 = vmax.f32 %v1864, 0.0
        %v1941 = vmax.f32 %v1869, 0.0
        %v1942 = vmax.f32 %v1872, 0.0
        %v1943 = vmax.f32 %v1877, 0.0
        %v1944 = vmax.f32 %v1880, 0.0
        %v1945 = vmax.f32 %v1885, 0.0
        %v1946 = vmax.f32 %v1888, 0.0
        %v1947 = vmax.f32 %v1893, 0.0
        %v1948 = vmax.f32 %v1896, 0.0
        %v1949 = vmax.f32 %v1901, 0.0
        %v1950 = vmax.f32 %v1904, 0.0
        %v1951 = vmax.f32 %v1909, 0.0
        %v1952 = vmax.f32 %v1912, 0.0
        %v1953 = vmax.f32 %v1917, 0.0
        %v1954 = vmax.f32 %v1920, 0.0
        %v1955 = vpack.c.bf16 %v1924, %v1923
        %v1956 = vpack.c.bf16 %v1926, %v1925
        %v1957 = vpack.c.bf16 %v1928, %v1927
        %v1958 = vpack.c.bf16 %v1930, %v1929
        %v1959 = vpack.c.bf16 %v1932, %v1931
        %v1960 = vpack.c.bf16 %v1934, %v1933
        %v1961 = vpack.c.bf16 %v1936, %v1935
        %v1962 = vpack.c.bf16 %v1938, %v1937
        %v1963 = vpack.c.bf16 %v1940, %v1939
        %v1964 = vpack.c.bf16 %v1942, %v1941
        %v1965 = vpack.c.bf16 %v1944, %v1943
        %v1966 = vpack.c.bf16 %v1946, %v1945
        %v1967 = vpack.c.bf16 %v1948, %v1947
        %v1968 = vpack.c.bf16 %v1950, %v1949
        %v1969 = vpack.c.bf16 %v1952, %v1951
        %v1970 = vpack.c.bf16 %v1954, %v1953
        %1971 = vmatprep.subr.bf16.mxu0 0
        %1972 = vmatpush1.bf16.msra.mxu0 %v1746
        %1973 = vmatprep.subr.bf16.mxu0 0
        %1974 = vmatpush1.bf16.msra.mxu0 %v1747
        %1975 = vmatprep.subr.bf16.mxu0 0
        %1976 = vmatpush1.bf16.msra.mxu0 %v1748
        %1977 = vmatprep.subr.bf16.mxu0 0
        %1978 = vmatpush1.bf16.msra.mxu0 %v1749
        %1979 = vmatprep.subr.bf16.mxu0 0
        %1980 = vmatpush1.bf16.msra.mxu0 %v1750
        %1981 = vmatprep.subr.bf16.mxu0 0
        %1982 = vmatpush1.bf16.msra.mxu0 %v1751
        %1983 = vmatprep.subr.bf16.mxu0 0
        %1984 = vmatpush1.bf16.msra.mxu0 %v1752
        %1985 = vmatprep.subr.bf16.mxu0 0
        %1986 = vmatpush1.bf16.msra.mxu0 %v1753
        %1987 = vmatprep.subr.bf16.mxu0 0
        %1988 = vmatpush1.bf16.msra.mxu0 0
        %1989 = vmatprep.subr.bf16.mxu0 0
        %1990 = vmatpush1.bf16.msra.mxu0 0
        %1991 = vmatprep.subr.bf16.mxu0 0
        %1992 = vmatpush1.bf16.msra.mxu0 0
        %1993 = vmatprep.subr.bf16.mxu0 0
        %1994 = vmatpush1.bf16.msra.mxu0 0
        %1995 = vmatprep.subr.bf16.mxu0 0
        %1996 = vmatpush1.bf16.msra.mxu0 0
        %1997 = vmatprep.subr.bf16.mxu0 0
        %1998 = vmatpush1.bf16.msra.mxu0 0
        %1999 = vmatprep.subr.bf16.mxu0 0
        %2000 = vmatpush1.bf16.msra.mxu0 0
        %2001 = vmatprep.subr.bf16.mxu0 0
        %2002 = vmatpush1.bf16.msra.mxu0 0
        %2003 = vmatprep.mubr.bf16.mxu0 0
        %2004 = vmatmul.mubr.bf16.gmra.mrb[0].mxu0 %v1955
        %v2005 = vpop.f32.mrb[0].mxu0
        %v2006 = vadd.f32 %v1712, %v2005
        %v2007 = vpop.f32.mrb[0].mxu0
        %v2008 = vpop.f32.mrb[0].mxu0
        %v2009 = vadd.f32 %v1712, %v2008
        %v2010 = vpop.f32.mrb[0].mxu0
        %2011 = vmatprep.mubr.bf16.mxu0 0
        %2012 = vmatmul.mubr.bf16.gmra.mrb[0].mxu0 %v1956
        %v2013 = vpop.f32.mrb[0].mxu0
        %v2014 = vadd.f32 %v1712, %v2013
        %v2015 = vpop.f32.mrb[0].mxu0
        %v2016 = vpop.f32.mrb[0].mxu0
        %v2017 = vadd.f32 %v1712, %v2016
        %v2018 = vpop.f32.mrb[0].mxu0
        %2019 = vmatprep.mubr.bf16.mxu0 0
        %2020 = vmatmul.mubr.bf16.gmra.mrb[0].mxu0 %v1957
        %v2021 = vpop.f32.mrb[0].mxu0
        %v2022 = vadd.f32 %v1712, %v2021
        %v2023 = vpop.f32.mrb[0].mxu0
        %v2024 = vpop.f32.mrb[0].mxu0
        %v2025 = vadd.f32 %v1712, %v2024
        %v2026 = vpop.f32.mrb[0].mxu0
        %2027 = vmatprep.mubr.bf16.mxu0 0
        %2028 = vmatmul.mubr.bf16.gmra.mrb[0].mxu0 %v1958
        %v2029 = vpop.f32.mrb[0].mxu0
        %v2030 = vadd.f32 %v1712, %v2029
        %v2031 = vpop.f32.mrb[0].mxu0
        %v2032 = vpop.f32.mrb[0].mxu0
        %v2033 = vadd.f32 %v1712, %v2032
        %v2034 = vpop.f32.mrb[0].mxu0
        %2035 = vmatprep.mubr.bf16.mxu0 0
        %2036 = vmatmul.mubr.bf16.gmra.mrb[0].mxu0 %v1959
        %v2037 = vpop.f32.mrb[0].mxu0
        %v2038 = vadd.f32 %v1712, %v2037
        %v2039 = vpop.f32.mrb[0].mxu0
        %v2040 = vpop.f32.mrb[0].mxu0
        %v2041 = vadd.f32 %v1712, %v2040
        %v2042 = vpop.f32.mrb[0].mxu0
        %2043 = vmatprep.mubr.bf16.mxu0 0
        %2044 = vmatmul.mubr.bf16.gmra.mrb[0].mxu0 %v1960
        %v2045 = vpop.f32.mrb[0].mxu0
        %v2046 = vadd.f32 %v1712, %v2045
        %v2047 = vpop.f32.mrb[0].mxu0
        %v2048 = vpop.f32.mrb[0].mxu0
        %v2049 = vadd.f32 %v1712, %v2048
        %v2050 = vpop.f32.mrb[0].mxu0
        %2051 = vmatprep.mubr.bf16.mxu0 0
        %2052 = vmatmul.mubr.bf16.gmra.mrb[0].mxu0 %v1961
        %v2053 = vpop.f32.mrb[0].mxu0
        %v2054 = vadd.f32 %v1712, %v2053
        %v2055 = vpop.f32.mrb[0].mxu0
        %v2056 = vpop.f32.mrb[0].mxu0
        %v2057 = vadd.f32 %v1712, %v2056
        %v2058 = vpop.f32.mrb[0].mxu0
        %2059 = vmatprep.mubr.bf16.mxu0 0
        %2060 = vmatmul.mubr.bf16.gmra.mrb[0].mxu0 %v1962
        %v2061 = vpop.f32.mrb[0].mxu0
        %v2062 = vadd.f32 %v1712, %v2061
        %v2063 = vpop.f32.mrb[0].mxu0
        %v2064 = vpop.f32.mrb[0].mxu0
        %v2065 = vadd.f32 %v1712, %v2064
        %v2066 = vpop.f32.mrb[0].mxu0
        %2067 = vmatprep.mubr.bf16.mxu0 0
        %2068 = vmatmul.mubr.bf16.gmra.mrb[0].mxu0 %v1963
        %v2069 = vpop.f32.mrb[0].mxu0
        %v2070 = vadd.f32 %v1712, %v2069
        %v2071 = vpop.f32.mrb[0].mxu0
        %v2072 = vpop.f32.mrb[0].mxu0
        %v2073 = vadd.f32 %v1712, %v2072
        %v2074 = vpop.f32.mrb[0].mxu0
        %2075 = vmatprep.mubr.bf16.mxu0 0
        %2076 = vmatmul.mubr.bf16.gmra.mrb[0].mxu0 %v1964
        %v2077 = vpop.f32.mrb[0].mxu0
        %v2078 = vadd.f32 %v1712, %v2077
        %v2079 = vpop.f32.mrb[0].mxu0
        %v2080 = vpop.f32.mrb[0].mxu0
        %v2081 = vadd.f32 %v1712, %v2080
        %v2082 = vpop.f32.mrb[0].mxu0
        %2083 = vmatprep.mubr.bf16.mxu0 0
        %2084 = vmatmul.mubr.bf16.gmra.mrb[0].mxu0 %v1965
        %v2085 = vpop.f32.mrb[0].mxu0
        %v2086 = vadd.f32 %v1712, %v2085
        %v2087 = vpop.f32.mrb[0].mxu0
        %v2088 = vpop.f32.mrb[0].mxu0
        %v2089 = vadd.f32 %v1712, %v2088
        %v2090 = vpop.f32.mrb[0].mxu0
        %2091 = vmatprep.mubr.bf16.mxu0 0
        %2092 = vmatmul.mubr.bf16.gmra.mrb[0].mxu0 %v1966
        %v2093 = vpop.f32.mrb[0].mxu0
        %v2094 = vadd.f32 %v1712, %v2093
        %v2095 = vpop.f32.mrb[0].mxu0
        %v2096 = vpop.f32.mrb[0].mxu0
        %v2097 = vadd.f32 %v1712, %v2096
        %v2098 = vpop.f32.mrb[0].mxu0
        %2099 = vmatprep.mubr.bf16.mxu0 0
        %2100 = vmatmul.mubr.bf16.gmra.mrb[0].mxu0 %v1967
        %v2101 = vpop.f32.mrb[0].mxu0
        %v2102 = vadd.f32 %v1712, %v2101
        %v2103 = vpop.f32.mrb[0].mxu0
        %v2104 = vpop.f32.mrb[0].mxu0
        %v2105 = vadd.f32 %v1712, %v2104
        %v2106 = vpop.f32.mrb[0].mxu0
        %2107 = vmatprep.mubr.bf16.mxu0 0
        %2108 = vmatmul.mubr.bf16.gmra.mrb[0].mxu0 %v1968
        %v2109 = vpop.f32.mrb[0].mxu0
        %v2110 = vadd.f32 %v1712, %v2109
        %v2111 = vpop.f32.mrb[0].mxu0
        %v2112 = vpop.f32.mrb[0].mxu0
        %v2113 = vadd.f32 %v1712, %v2112
        %v2114 = vpop.f32.mrb[0].mxu0
        %2115 = vmatprep.mubr.bf16.mxu0 0
        %2116 = vmatmul.mubr.bf16.gmra.mrb[0].mxu0 %v1969
        %v2117 = vpop.f32.mrb[0].mxu0
        %v2118 = vadd.f32 %v1712, %v2117
        %v2119 = vpop.f32.mrb[0].mxu0
        %v2120 = vpop.f32.mrb[0].mxu0
        %v2121 = vadd.f32 %v1712, %v2120
        %v2122 = vpop.f32.mrb[0].mxu0
        %2123 = vmatprep.mubr.bf16.mxu0 0
        %2124 = vmatmul.mubr.bf16.gmra.mrb[0].mxu0 %v1970
        %v2125 = vpop.f32.mrb[0].mxu0
        %v2126 = vadd.f32 %v1712, %v2125
        %v2127 = vpop.f32.mrb[0].mxu0
        %v2128 = vpop.f32.mrb[0].mxu0
        %v2129 = vadd.f32 %v1712, %v2128
        %v2130 = vpop.f32.mrb[0].mxu0
        %2131 = vdwg.mxu0
        %v2132 = vmax.f32 %v2006, 0.0
        %v2133 = vmax.f32 %v2009, 0.0
        %v2134 = vmax.f32 %v2014, 0.0
        %v2135 = vmax.f32 %v2017, 0.0
        %v2136 = vmax.f32 %v2022, 0.0
        %v2137 = vmax.f32 %v2025, 0.0
        %v2138 = vmax.f32 %v2030, 0.0
        %v2139 = vmax.f32 %v2033, 0.0
        %v2140 = vmax.f32 %v2038, 0.0
        %v2141 = vmax.f32 %v2041, 0.0
        %v2142 = vmax.f32 %v2046, 0.0
        %v2143 = vmax.f32 %v2049, 0.0
        %v2144 = vmax.f32 %v2054, 0.0
        %v2145 = vmax.f32 %v2057, 0.0
        %v2146 = vmax.f32 %v2062, 0.0
        %v2147 = vmax.f32 %v2065, 0.0
        %v2148 = vmax.f32 %v2070, 0.0
        %v2149 = vmax.f32 %v2073, 0.0
        %v2150 = vmax.f32 %v2078, 0.0
        %v2151 = vmax.f32 %v2081, 0.0
        %v2152 = vmax.f32 %v2086, 0.0
        %v2153 = vmax.f32 %v2089, 0.0
        %v2154 = vmax.f32 %v2094, 0.0
        %v2155 = vmax.f32 %v2097, 0.0
        %v2156 = vmax.f32 %v2102, 0.0
        %v2157 = vmax.f32 %v2105, 0.0
        %v2158 = vmax.f32 %v2110, 0.0
        %v2159 = vmax.f32 %v2113, 0.0
        %v2160 = vmax.f32 %v2118, 0.0
        %v2161 = vmax.f32 %v2121, 0.0
        %v2162 = vmax.f32 %v2126, 0.0
        %v2163 = vmax.f32 %v2129, 0.0
        %v2164 = vpack.c.bf16 %v2133, %v2132
        %v2165 = vpack.c.bf16 %v2135, %v2134
        %v2166 = vpack.c.bf16 %v2137, %v2136
        %v2167 = vpack.c.bf16 %v2139, %v2138
        %v2168 = vpack.c.bf16 %v2141, %v2140
        %v2169 = vpack.c.bf16 %v2143, %v2142
        %v2170 = vpack.c.bf16 %v2145, %v2144
        %v2171 = vpack.c.bf16 %v2147, %v2146
        %v2172 = vpack.c.bf16 %v2149, %v2148
        %v2173 = vpack.c.bf16 %v2151, %v2150
        %v2174 = vpack.c.bf16 %v2153, %v2152
        %v2175 = vpack.c.bf16 %v2155, %v2154
        %v2176 = vpack.c.bf16 %v2157, %v2156
        %v2177 = vpack.c.bf16 %v2159, %v2158
        %v2178 = vpack.c.bf16 %v2161, %v2160
        %v2179 = vpack.c.bf16 %v2163, %v2162
        %2180 = vmatprep.subr.bf16.mxu0 0
        %2181 = vmatpush1.bf16.msra.mxu0 %v1746
        %2182 = vmatprep.subr.bf16.mxu0 0
        %2183 = vmatpush1.bf16.msra.mxu0 %v1747
        %2184 = vmatprep.subr.bf16.mxu0 0
        %2185 = vmatpush1.bf16.msra.mxu0 %v1748
        %2186 = vmatprep.subr.bf16.mxu0 0
        %2187 = vmatpush1.bf16.msra.mxu0 %v1749
        %2188 = vmatprep.subr.bf16.mxu0 0
        %2189 = vmatpush1.bf16.msra.mxu0 %v1750
        %2190 = vmatprep.subr.bf16.mxu0 0
        %2191 = vmatpush1.bf16.msra.mxu0 %v1751
        %2192 = vmatprep.subr.bf16.mxu0 0
        %2193 = vmatpush1.bf16.msra.mxu0 %v1752
        %2194 = vmatprep.subr.bf16.mxu0 0
        %2195 = vmatpush1.bf16.msra.mxu0 %v1753
        %2196 = vmatprep.subr.bf16.mxu0 0
        %2197 = vmatpush1.bf16.msra.mxu0 0
        %2198 = vmatprep.subr.bf16.mxu0 0
        %2199 = vmatpush1.bf16.msra.mxu0 0
        %2200 = vmatprep.subr.bf16.mxu0 0
        %2201 = vmatpush1.bf16.msra.mxu0 0
        %2202 = vmatprep.subr.bf16.mxu0 0
        %2203 = vmatpush1.bf16.msra.mxu0 0
        %2204 = vmatprep.subr.bf16.mxu0 0
        %2205 = vmatpush1.bf16.msra.mxu0 0
        %2206 = vmatprep.subr.bf16.mxu0 0
        %2207 = vmatpush1.bf16.msra.mxu0 0
        %2208 = vmatprep.subr.bf16.mxu0 0
        %2209 = vmatpush1.bf16.msra.mxu0 0
        %2210 = vmatprep.subr.bf16.mxu0 0
        %2211 = vmatpush1.bf16.msra.mxu0 0
        %2212 = vmatprep.mubr.bf16.mxu0 0
        %2213 = vmatmul.mubr.bf16.gmra.mrb[0].mxu0 %v2164
        %v2214 = vpop.f32.mrb[0].mxu0
        %v2215 = vadd.f32 %v1712, %v2214
        %v2216 = vpop.f32.mrb[0].mxu0
        %v2217 = vpop.f32.mrb[0].mxu0
        %v2218 = vadd.f32 %v1712, %v2217
        %v2219 = vpop.f32.mrb[0].mxu0
        %2220 = vmatprep.mubr.bf16.mxu0 0
        %2221 = vmatmul.mubr.bf16.gmra.mrb[0].mxu0 %v2165
        %v2222 = vpop.f32.mrb[0].mxu0
        %v2223 = vadd.f32 %v1712, %v2222
        %v2224 = vpop.f32.mrb[0].mxu0
        %v2225 = vpop.f32.mrb[0].mxu0
        %v2226 = vadd.f32 %v1712, %v2225
        %v2227 = vpop.f32.mrb[0].mxu0
        %2228 = vmatprep.mubr.bf16.mxu0 0
        %2229 = vmatmul.mubr.bf16.gmra.mrb[0].mxu0 %v2166
        %v2230 = vpop.f32.mrb[0].mxu0
        %v2231 = vadd.f32 %v1712, %v2230
        %v2232 = vpop.f32.mrb[0].mxu0
        %v2233 = vpop.f32.mrb[0].mxu0
        %v2234 = vadd.f32 %v1712, %v2233
        %v2235 = vpop.f32.mrb[0].mxu0
        %2236 = vmatprep.mubr.bf16.mxu0 0
        %2237 = vmatmul.mubr.bf16.gmra.mrb[0].mxu0 %v2167
        %v2238 = vpop.f32.mrb[0].mxu0
        %v2239 = vadd.f32 %v1712, %v2238
        %v2240 = vpop.f32.mrb[0].mxu0
        %v2241 = vpop.f32.mrb[0].mxu0
        %v2242 = vadd.f32 %v1712, %v2241
        %v2243 = vpop.f32.mrb[0].mxu0
        %2244 = vmatprep.mubr.bf16.mxu0 0
        %2245 = vmatmul.mubr.bf16.gmra.mrb[0].mxu0 %v2168
        %v2246 = vpop.f32.mrb[0].mxu0
        %v2247 = vadd.f32 %v1712, %v2246
        %v2248 = vpop.f32.mrb[0].mxu0
        %v2249 = vpop.f32.mrb[0].mxu0
        %v2250 = vadd.f32 %v1712, %v2249
        %v2251 = vpop.f32.mrb[0].mxu0
        %2252 = vmatprep.mubr.bf16.mxu0 0
        %2253 = vmatmul.mubr.bf16.gmra.mrb[0].mxu0 %v2169
        %v2254 = vpop.f32.mrb[0].mxu0
        %v2255 = vadd.f32 %v1712, %v2254
        %v2256 = vpop.f32.mrb[0].mxu0
        %v2257 = vpop.f32.mrb[0].mxu0
        %v2258 = vadd.f32 %v1712, %v2257
        %v2259 = vpop.f32.mrb[0].mxu0
        %2260 = vmatprep.mubr.bf16.mxu0 0
        %2261 = vmatmul.mubr.bf16.gmra.mrb[0].mxu0 %v2170
        %v2262 = vpop.f32.mrb[0].mxu0
        %v2263 = vadd.f32 %v1712, %v2262
        %v2264 = vpop.f32.mrb[0].mxu0
        %v2265 = vpop.f32.mrb[0].mxu0
        %v2266 = vadd.f32 %v1712, %v2265
        %v2267 = vpop.f32.mrb[0].mxu0
        %2268 = vmatprep.mubr.bf16.mxu0 0
        %2269 = vmatmul.mubr.bf16.gmra.mrb[0].mxu0 %v2171
        %v2270 = vpop.f32.mrb[0].mxu0
        %v2271 = vadd.f32 %v1712, %v2270
        %v2272 = vpop.f32.mrb[0].mxu0
        %v2273 = vpop.f32.mrb[0].mxu0
        %v2274 = vadd.f32 %v1712, %v2273
        %v2275 = vpop.f32.mrb[0].mxu0
        %2276 = vmatprep.mubr.bf16.mxu0 0
        %2277 = vmatmul.mubr.bf16.gmra.mrb[0].mxu0 %v2172
        %v2278 = vpop.f32.mrb[0].mxu0
        %v2279 = vadd.f32 %v1712, %v2278
        %v2280 = vpop.f32.mrb[0].mxu0
        %v2281 = vpop.f32.mrb[0].mxu0
        %v2282 = vadd.f32 %v1712, %v2281
        %v2283 = vpop.f32.mrb[0].mxu0
        %2284 = vmatprep.mubr.bf16.mxu0 0
        %2285 = vmatmul.mubr.bf16.gmra.mrb[0].mxu0 %v2173
        %v2286 = vpop.f32.mrb[0].mxu0
        %v2287 = vadd.f32 %v1712, %v2286
        %v2288 = vpop.f32.mrb[0].mxu0
        %v2289 = vpop.f32.mrb[0].mxu0
        %v2290 = vadd.f32 %v1712, %v2289
        %v2291 = vpop.f32.mrb[0].mxu0
        %2292 = vmatprep.mubr.bf16.mxu0 0
        %2293 = vmatmul.mubr.bf16.gmra.mrb[0].mxu0 %v2174
        %v2294 = vpop.f32.mrb[0].mxu0
        %v2295 = vadd.f32 %v1712, %v2294
        %v2296 = vpop.f32.mrb[0].mxu0
        %v2297 = vpop.f32.mrb[0].mxu0
        %v2298 = vadd.f32 %v1712, %v2297
        %v2299 = vpop.f32.mrb[0].mxu0
        %2300 = vmatprep.mubr.bf16.mxu0 0
        %2301 = vmatmul.mubr.bf16.gmra.mrb[0].mxu0 %v2175
        %v2302 = vpop.f32.mrb[0].mxu0
        %v2303 = vadd.f32 %v1712, %v2302
        %v2304 = vpop.f32.mrb[0].mxu0
        %v2305 = vpop.f32.mrb[0].mxu0
        %v2306 = vadd.f32 %v1712, %v2305
        %v2307 = vpop.f32.mrb[0].mxu0
        %2308 = vmatprep.mubr.bf16.mxu0 0
        %2309 = vmatmul.mubr.bf16.gmra.mrb[0].mxu0 %v2176
        %v2310 = vpop.f32.mrb[0].mxu0
        %v2311 = vadd.f32 %v1712, %v2310
        %v2312 = vpop.f32.mrb[0].mxu0
        %v2313 = vpop.f32.mrb[0].mxu0
        %v2314 = vadd.f32 %v1712, %v2313
        %v2315 = vpop.f32.mrb[0].mxu0
        %2316 = vmatprep.mubr.bf16.mxu0 0
        %2317 = vmatmul.mubr.bf16.gmra.mrb[0].mxu0 %v2177
        %v2318 = vpop.f32.mrb[0].mxu0
        %v2319 = vadd.f32 %v1712, %v2318
        %v2320 = vpop.f32.mrb[0].mxu0
        %v2321 = vpop.f32.mrb[0].mxu0
        %v2322 = vadd.f32 %v1712, %v2321
        %v2323 = vpop.f32.mrb[0].mxu0
        %2324 = vmatprep.mubr.bf16.mxu0 0
        %2325 = vmatmul.mubr.bf16.gmra.mrb[0].mxu0 %v2178
        %v2326 = vpop.f32.mrb[0].mxu0
        %v2327 = vadd.f32 %v1712, %v2326
        %v2328 = vpop.f32.mrb[0].mxu0
        %v2329 = vpop.f32.mrb[0].mxu0
        %v2330 = vadd.f32 %v1712, %v2329
        %v2331 = vpop.f32.mrb[0].mxu0
        %2332 = vmatprep.mubr.bf16.mxu0 0
        %2333 = vmatmul.mubr.bf16.gmra.mrb[0].mxu0 %v2179
        %v2334 = vpop.f32.mrb[0].mxu0
        %v2335 = vadd.f32 %v1712, %v2334
        %v2336 = vpop.f32.mrb[0].mxu0
        %v2337 = vpop.f32.mrb[0].mxu0
        %v2338 = vadd.f32 %v1712, %v2337
        %v2339 = vpop.f32.mrb[0].mxu0
        %2340 = vdwg.mxu0
        %v2341 = vmax.f32 %v2215, 0.0
        %v2342 = vmax.f32 %v2218, 0.0
        %v2343 = vmax.f32 %v2223, 0.0
        %v2344 = vmax.f32 %v2226, 0.0
        %v2345 = vmax.f32 %v2231, 0.0
        %v2346 = vmax.f32 %v2234, 0.0
        %v2347 = vmax.f32 %v2239, 0.0
        %v2348 = vmax.f32 %v2242, 0.0
        %v2349 = vmax.f32 %v2247, 0.0
        %v2350 = vmax.f32 %v2250, 0.0
        %v2351 = vmax.f32 %v2255, 0.0
        %v2352 = vmax.f32 %v2258, 0.0
        %v2353 = vmax.f32 %v2263, 0.0
        %v2354 = vmax.f32 %v2266, 0.0
        %v2355 = vmax.f32 %v2271, 0.0
        %v2356 = vmax.f32 %v2274, 0.0
        %v2357 = vmax.f32 %v2279, 0.0
        %v2358 = vmax.f32 %v2282, 0.0
        %v2359 = vmax.f32 %v2287, 0.0
        %v2360 = vmax.f32 %v2290, 0.0
        %v2361 = vmax.f32 %v2295, 0.0
        %v2362 = vmax.f32 %v2298, 0.0
        %v2363 = vmax.f32 %v2303, 0.0
        %v2364 = vmax.f32 %v2306, 0.0
        %v2365 = vmax.f32 %v2311, 0.0
        %v2366 = vmax.f32 %v2314, 0.0
        %v2367 = vmax.f32 %v2319, 0.0
        %v2368 = vmax.f32 %v2322, 0.0
        %v2369 = vmax.f32 %v2327, 0.0
        %v2370 = vmax.f32 %v2330, 0.0
        %v2371 = vmax.f32 %v2335, 0.0
        %v2372 = vmax.f32 %v2338, 0.0
        %v2373 = vpack.c.bf16 %v2342, %v2341
        %v2374 = vpack.c.bf16 %v2344, %v2343
        %v2375 = vpack.c.bf16 %v2346, %v2345
        %v2376 = vpack.c.bf16 %v2348, %v2347
        %v2377 = vpack.c.bf16 %v2350, %v2349
        %v2378 = vpack.c.bf16 %v2352, %v2351
        %v2379 = vpack.c.bf16 %v2354, %v2353
        %v2380 = vpack.c.bf16 %v2356, %v2355
        %v2381 = vpack.c.bf16 %v2358, %v2357
        %v2382 = vpack.c.bf16 %v2360, %v2359
        %v2383 = vpack.c.bf16 %v2362, %v2361
        %v2384 = vpack.c.bf16 %v2364, %v2363
        %v2385 = vpack.c.bf16 %v2366, %v2365
        %v2386 = vpack.c.bf16 %v2368, %v2367
        %v2387 = vpack.c.bf16 %v2370, %v2369
        %v2388 = vpack.c.bf16 %v2372, %v2371
        %v2389 = vld [vmem:[%s11] sm:$0xf]
        %v2390 = vld [vmem:[%s11 + $0x4] sm:$0xf]
        %v2391 = vld [vmem:[%s11 + $0x8] sm:$0xf]
        %v2392 = vld [vmem:[%s11 + $0xc] sm:$0xf]
        %v2393 = vld [vmem:[%s11 + $0x10] sm:$0xf]
        %v2394 = vld [vmem:[%s11 + $0x14] sm:$0xf]
        %v2395 = vld [vmem:[%s11 + $0x18] sm:$0xf]
        %v2396 = vld [vmem:[%s11 + $0x1c] sm:$0xf]
        %v2397 = vld [vmem:[%s11 + $0x20] sm:$0xf]
        %v2398 = vld [vmem:[%s11 + $0x24] sm:$0xf]
        %v2399 = vld [vmem:[%s11 + $0x28] sm:$0xf]
        %v2400 = vld [vmem:[%s11 + $0x2c] sm:$0xf]
        %v2401 = vld [vmem:[%s11 + $0x30] sm:$0xf]
        %v2402 = vld [vmem:[%s11 + $0x34] sm:$0xf]
        %v2403 = vld [vmem:[%s11 + $0x38] sm:$0xf]
        %v2404 = vld [vmem:[%s11 + $0x3c] sm:$0xf]
        %v2405 = vld [vmem:[%s12] sm:$0x1]
        %v2407 = vlaneseq
        %v2408 = vshrl.u32 %v2407, 7
        %v2409 = vsub.s32 0, %v2408
        %v2410 = vrot.slane %v2405, %v2409
        %v2428 = vunpack.c.l.b16 %v2389
        %v2429 = vunpack.c.l.b16 %v2390
        %v2430 = vunpack.c.l.b16 %v2391
        %v2431 = vunpack.c.l.b16 %v2392
        %v2432 = vunpack.c.l.b16 %v2393
        %v2433 = vunpack.c.l.b16 %v2394
        %v2434 = vunpack.c.l.b16 %v2395
        %v2435 = vunpack.c.l.b16 %v2396
        %v2436 = vunpack.c.l.b16 %v2397
        %v2437 = vunpack.c.l.b16 %v2398
        %v2438 = vunpack.c.l.b16 %v2399
        %v2439 = vunpack.c.l.b16 %v2400
        %v2440 = vunpack.c.l.b16 %v2401
        %v2441 = vunpack.c.l.b16 %v2402
        %v2442 = vunpack.c.l.b16 %v2403
        %v2443 = vunpack.c.l.b16 %v2404
        %v2444 = vpack.c.b16 %v2429, %v2428
        %v2445 = vpack.c.b16 %v2431, %v2430
        %v2446 = vpack.c.b16 %v2433, %v2432
        %v2447 = vpack.c.b16 %v2435, %v2434
        %v2448 = vpack.c.b16 %v2437, %v2436
        %v2449 = vpack.c.b16 %v2439, %v2438
        %v2450 = vpack.c.b16 %v2441, %v2440
        %v2451 = vpack.c.b16 %v2443, %v2442
        %2460 = vmatprep.subr.bf16.mxu0 0
        %2461 = vmatpush1.bf16.msra.mxu0 %v2444
        %2462 = vmatprep.subr.bf16.mxu0 0
        %2463 = vmatpush1.bf16.msra.mxu0 %v2445
        %2464 = vmatprep.subr.bf16.mxu0 0
        %2465 = vmatpush1.bf16.msra.mxu0 %v2446
        %2466 = vmatprep.subr.bf16.mxu0 0
        %2467 = vmatpush1.bf16.msra.mxu0 %v2447
        %2468 = vmatprep.subr.bf16.mxu0 0
        %2469 = vmatpush1.bf16.msra.mxu0 %v2448
        %2470 = vmatprep.subr.bf16.mxu0 0
        %2471 = vmatpush1.bf16.msra.mxu0 %v2449
        %2472 = vmatprep.subr.bf16.mxu0 0
        %2473 = vmatpush1.bf16.msra.mxu0 %v2450
        %2474 = vmatprep.subr.bf16.mxu0 0
        %2475 = vmatpush1.bf16.msra.mxu0 %v2451
        %2476 = vmatprep.subr.bf16.mxu0 0
        %2477 = vmatpush1.bf16.msra.mxu0 0
        %2478 = vmatprep.subr.bf16.mxu0 0
        %2479 = vmatpush1.bf16.msra.mxu0 0
        %2480 = vmatprep.subr.bf16.mxu0 0
        %2481 = vmatpush1.bf16.msra.mxu0 0
        %2482 = vmatprep.subr.bf16.mxu0 0
        %2483 = vmatpush1.bf16.msra.mxu0 0
        %2484 = vmatprep.subr.bf16.mxu0 0
        %2485 = vmatpush1.bf16.msra.mxu0 0
        %2486 = vmatprep.subr.bf16.mxu0 0
        %2487 = vmatpush1.bf16.msra.mxu0 0
        %2488 = vmatprep.subr.bf16.mxu0 0
        %2489 = vmatpush1.bf16.msra.mxu0 0
        %2490 = vmatprep.subr.bf16.mxu0 0
        %2491 = vmatpush1.bf16.msra.mxu0 0
        %2492 = vmatprep.mubr.bf16.mxu0 0
        %2493 = vmatmul.mubr.bf16.gmra.mrb[0].mxu0 %v2373
        %v2494 = vpop.f32.mrb[0].mxu0
        %v2495 = vadd.f32 %v2410, %v2494
        %v2496 = vpop.f32.mrb[0].mxu0
        %v2497 = vpop.f32.mrb[0].mxu0
        %v2498 = vadd.f32 %v2410, %v2497
        %v2499 = vpop.f32.mrb[0].mxu0
        %2500 = vmatprep.mubr.bf16.mxu0 0
        %2501 = vmatmul.mubr.bf16.gmra.mrb[0].mxu0 %v2374
        %v2502 = vpop.f32.mrb[0].mxu0
        %v2503 = vadd.f32 %v2410, %v2502
        %v2504 = vpop.f32.mrb[0].mxu0
        %v2505 = vpop.f32.mrb[0].mxu0
        %v2506 = vadd.f32 %v2410, %v2505
        %v2507 = vpop.f32.mrb[0].mxu0
        %2508 = vmatprep.mubr.bf16.mxu0 0
        %2509 = vmatmul.mubr.bf16.gmra.mrb[0].mxu0 %v2375
        %v2510 = vpop.f32.mrb[0].mxu0
        %v2511 = vadd.f32 %v2410, %v2510
        %v2512 = vpop.f32.mrb[0].mxu0
        %v2513 = vpop.f32.mrb[0].mxu0
        %v2514 = vadd.f32 %v2410, %v2513
        %v2515 = vpop.f32.mrb[0].mxu0
        %2516 = vmatprep.mubr.bf16.mxu0 0
        %2517 = vmatmul.mubr.bf16.gmra.mrb[0].mxu0 %v2376
        %v2518 = vpop.f32.mrb[0].mxu0
        %v2519 = vadd.f32 %v2410, %v2518
        %v2520 = vpop.f32.mrb[0].mxu0
        %v2521 = vpop.f32.mrb[0].mxu0
        %v2522 = vadd.f32 %v2410, %v2521
        %v2523 = vpop.f32.mrb[0].mxu0
        %2524 = vmatprep.mubr.bf16.mxu0 0
        %2525 = vmatmul.mubr.bf16.gmra.mrb[0].mxu0 %v2377
        %v2526 = vpop.f32.mrb[0].mxu0
        %v2527 = vadd.f32 %v2410, %v2526
        %v2528 = vpop.f32.mrb[0].mxu0
        %v2529 = vpop.f32.mrb[0].mxu0
        %v2530 = vadd.f32 %v2410, %v2529
        %v2531 = vpop.f32.mrb[0].mxu0
        %2532 = vmatprep.mubr.bf16.mxu0 0
        %2533 = vmatmul.mubr.bf16.gmra.mrb[0].mxu0 %v2378
        %v2534 = vpop.f32.mrb[0].mxu0
        %v2535 = vadd.f32 %v2410, %v2534
        %v2536 = vpop.f32.mrb[0].mxu0
        %v2537 = vpop.f32.mrb[0].mxu0
        %v2538 = vadd.f32 %v2410, %v2537
        %v2539 = vpop.f32.mrb[0].mxu0
        %2540 = vmatprep.mubr.bf16.mxu0 0
        %2541 = vmatmul.mubr.bf16.gmra.mrb[0].mxu0 %v2379
        %v2542 = vpop.f32.mrb[0].mxu0
        %v2543 = vadd.f32 %v2410, %v2542
        %v2544 = vpop.f32.mrb[0].mxu0
        %v2545 = vpop.f32.mrb[0].mxu0
        %v2546 = vadd.f32 %v2410, %v2545
        %v2547 = vpop.f32.mrb[0].mxu0
        %2548 = vmatprep.mubr.bf16.mxu0 0
        %2549 = vmatmul.mubr.bf16.gmra.mrb[0].mxu0 %v2380
        %v2550 = vpop.f32.mrb[0].mxu0
        %v2551 = vadd.f32 %v2410, %v2550
        %v2552 = vpop.f32.mrb[0].mxu0
        %v2553 = vpop.f32.mrb[0].mxu0
        %v2554 = vadd.f32 %v2410, %v2553
        %v2555 = vpop.f32.mrb[0].mxu0
        %2556 = vmatprep.mubr.bf16.mxu0 0
        %2557 = vmatmul.mubr.bf16.gmra.mrb[0].mxu0 %v2381
        %v2558 = vpop.f32.mrb[0].mxu0
        %v2559 = vadd.f32 %v2410, %v2558
        %v2560 = vpop.f32.mrb[0].mxu0
        %v2561 = vpop.f32.mrb[0].mxu0
        %v2562 = vadd.f32 %v2410, %v2561
        %v2563 = vpop.f32.mrb[0].mxu0
        %2564 = vmatprep.mubr.bf16.mxu0 0
        %2565 = vmatmul.mubr.bf16.gmra.mrb[0].mxu0 %v2382
        %v2566 = vpop.f32.mrb[0].mxu0
        %v2567 = vadd.f32 %v2410, %v2566
        %v2568 = vpop.f32.mrb[0].mxu0
        %v2569 = vpop.f32.mrb[0].mxu0
        %v2570 = vadd.f32 %v2410, %v2569
        %v2571 = vpop.f32.mrb[0].mxu0
        %2572 = vmatprep.mubr.bf16.mxu0 0
        %2573 = vmatmul.mubr.bf16.gmra.mrb[0].mxu0 %v2383
        %v2574 = vpop.f32.mrb[0].mxu0
        %v2575 = vadd.f32 %v2410, %v2574
        %v2576 = vpop.f32.mrb[0].mxu0
        %v2577 = vpop.f32.mrb[0].mxu0
        %v2578 = vadd.f32 %v2410, %v2577
        %v2579 = vpop.f32.mrb[0].mxu0
        %2580 = vmatprep.mubr.bf16.mxu0 0
        %2581 = vmatmul.mubr.bf16.gmra.mrb[0].mxu0 %v2384
        %v2582 = vpop.f32.mrb[0].mxu0
        %v2583 = vadd.f32 %v2410, %v2582
        %v2584 = vpop.f32.mrb[0].mxu0
        %v2585 = vpop.f32.mrb[0].mxu0
        %v2586 = vadd.f32 %v2410, %v2585
        %v2587 = vpop.f32.mrb[0].mxu0
        %2588 = vmatprep.mubr.bf16.mxu0 0
        %2589 = vmatmul.mubr.bf16.gmra.mrb[0].mxu0 %v2385
        %v2590 = vpop.f32.mrb[0].mxu0
        %v2591 = vadd.f32 %v2410, %v2590
        %v2592 = vpop.f32.mrb[0].mxu0
        %v2593 = vpop.f32.mrb[0].mxu0
        %v2594 = vadd.f32 %v2410, %v2593
        %v2595 = vpop.f32.mrb[0].mxu0
        %2596 = vmatprep.mubr.bf16.mxu0 0
        %2597 = vmatmul.mubr.bf16.gmra.mrb[0].mxu0 %v2386
        %v2598 = vpop.f32.mrb[0].mxu0
        %v2599 = vadd.f32 %v2410, %v2598
        %v2600 = vpop.f32.mrb[0].mxu0
        %v2601 = vpop.f32.mrb[0].mxu0
        %v2602 = vadd.f32 %v2410, %v2601
        %v2603 = vpop.f32.mrb[0].mxu0
        %2604 = vmatprep.mubr.bf16.mxu0 0
        %2605 = vmatmul.mubr.bf16.gmra.mrb[0].mxu0 %v2387
        %v2606 = vpop.f32.mrb[0].mxu0
        %v2607 = vadd.f32 %v2410, %v2606
        %v2608 = vpop.f32.mrb[0].mxu0
        %v2609 = vpop.f32.mrb[0].mxu0
        %v2610 = vadd.f32 %v2410, %v2609
        %v2611 = vpop.f32.mrb[0].mxu0
        %2612 = vmatprep.mubr.bf16.mxu0 0
        %2613 = vmatmul.mubr.bf16.gmra.mrb[0].mxu0 %v2388
        %v2614 = vpop.f32.mrb[0].mxu0
        %v2615 = vadd.f32 %v2410, %v2614
        %v2616 = vpop.f32.mrb[0].mxu0
        %v2617 = vpop.f32.mrb[0].mxu0
        %v2618 = vadd.f32 %v2410, %v2617
        %v2619 = vpop.f32.mrb[0].mxu0
        %2620 = vdwg.mxu0
        %v2621 = vsub.f32 0.0, %v2495
        %v2622 = vsub.f32 0.0, %v2498
        %v2623 = vsub.f32 0.0, %v2503
        %v2624 = vsub.f32 0.0, %v2506
        %v2625 = vsub.f32 0.0, %v2511
        %v2626 = vsub.f32 0.0, %v2514
        %v2627 = vsub.f32 0.0, %v2519
        %v2628 = vsub.f32 0.0, %v2522
        %v2629 = vsub.f32 0.0, %v2527
        %v2630 = vsub.f32 0.0, %v2530
        %v2631 = vsub.f32 0.0, %v2535
        %v2632 = vsub.f32 0.0, %v2538
        %v2633 = vsub.f32 0.0, %v2543
        %v2634 = vsub.f32 0.0, %v2546
        %v2635 = vsub.f32 0.0, %v2551
        %v2636 = vsub.f32 0.0, %v2554
        %v2637 = vsub.f32 0.0, %v2559
        %v2638 = vsub.f32 0.0, %v2562
        %v2639 = vsub.f32 0.0, %v2567
        %v2640 = vsub.f32 0.0, %v2570
        %v2641 = vsub.f32 0.0, %v2575
        %v2642 = vsub.f32 0.0, %v2578
        %v2643 = vsub.f32 0.0, %v2583
        %v2644 = vsub.f32 0.0, %v2586
        %v2645 = vsub.f32 0.0, %v2591
        %v2646 = vsub.f32 0.0, %v2594
        %v2647 = vsub.f32 0.0, %v2599
        %v2648 = vsub.f32 0.0, %v2602
        %v2649 = vsub.f32 0.0, %v2607
        %v2650 = vsub.f32 0.0, %v2610
        %v2651 = vsub.f32 0.0, %v2615
        %v2652 = vsub.f32 0.0, %v2618
        %v2653 = vmul.f32 %v2621, 1.442695
        %v2654 = vpow.pop %v2653
        %v2655 = vmul.f32 %v2622, 1.442695
        %v2656 = vpow.pop %v2655
        %v2657 = vmul.f32 %v2623, 1.442695
        %v2658 = vpow.pop %v2657
        %v2659 = vmul.f32 %v2624, 1.442695
        %v2660 = vpow.pop %v2659
        %v2661 = vmul.f32 %v2625, 1.442695
        %v2662 = vpow.pop %v2661
        %v2663 = vmul.f32 %v2626, 1.442695
        %v2664 = vpow.pop %v2663
        %v2665 = vmul.f32 %v2627, 1.442695
        %v2666 = vpow.pop %v2665
        %v2667 = vmul.f32 %v2628, 1.442695
        %v2668 = vpow.pop %v2667
        %v2669 = vmul.f32 %v2629, 1.442695
        %v2670 = vpow.pop %v2669
        %v2671 = vmul.f32 %v2630, 1.442695
        %v2672 = vpow.pop %v2671
        %v2673 = vmul.f32 %v2631, 1.442695
        %v2674 = vpow.pop %v2673
        %v2675 = vmul.f32 %v2632, 1.442695
        %v2676 = vpow.pop %v2675
        %v2677 = vmul.f32 %v2633, 1.442695
        %v2678 = vpow.pop %v2677
        %v2679 = vmul.f32 %v2634, 1.442695
        %v2680 = vpow.pop %v2679
        %v2681 = vmul.f32 %v2635, 1.442695
        %v2682 = vpow.pop %v2681
        %v2683 = vmul.f32 %v2636, 1.442695
        %v2684 = vpow.pop %v2683
        %v2685 = vmul.f32 %v2637, 1.442695
        %v2686 = vpow.pop %v2685
        %v2687 = vmul.f32 %v2638, 1.442695
        %v2688 = vpow.pop %v2687
        %v2689 = vmul.f32 %v2639, 1.442695
        %v2690 = vpow.pop %v2689
        %v2691 = vmul.f32 %v2640, 1.442695
        %v2692 = vpow.pop %v2691
        %v2693 = vmul.f32 %v2641, 1.442695
        %v2694 = vpow.pop %v2693
        %v2695 = vmul.f32 %v2642, 1.442695
        %v2696 = vpow.pop %v2695
        %v2697 = vmul.f32 %v2643, 1.442695
        %v2698 = vpow.pop %v2697
        %v2699 = vmul.f32 %v2644, 1.442695
        %v2700 = vpow.pop %v2699
        %v2701 = vmul.f32 %v2645, 1.442695
        %v2702 = vpow.pop %v2701
        %v2703 = vmul.f32 %v2646, 1.442695
        %v2704 = vpow.pop %v2703
        %v2705 = vmul.f32 %v2647, 1.442695
        %v2706 = vpow.pop %v2705
        %v2707 = vmul.f32 %v2648, 1.442695
        %v2708 = vpow.pop %v2707
        %v2709 = vmul.f32 %v2649, 1.442695
        %v2710 = vpow.pop %v2709
        %v2711 = vmul.f32 %v2650, 1.442695
        %v2712 = vpow.pop %v2711
        %v2713 = vmul.f32 %v2651, 1.442695
        %v2714 = vpow.pop %v2713
        %v2715 = vmul.f32 %v2652, 1.442695
        %v2716 = vpow.pop %v2715
        %v2717 = vadd.f32 %v2654, 1.0
        %v2718 = vadd.f32 %v2656, 1.0
        %v2719 = vadd.f32 %v2658, 1.0
        %v2720 = vadd.f32 %v2660, 1.0
        %v2721 = vadd.f32 %v2662, 1.0
        %v2722 = vadd.f32 %v2664, 1.0
        %v2723 = vadd.f32 %v2666, 1.0
        %v2724 = vadd.f32 %v2668, 1.0
        %v2725 = vadd.f32 %v2670, 1.0
        %v2726 = vadd.f32 %v2672, 1.0
        %v2727 = vadd.f32 %v2674, 1.0
        %v2728 = vadd.f32 %v2676, 1.0
        %v2729 = vadd.f32 %v2678, 1.0
        %v2730 = vadd.f32 %v2680, 1.0
        %v2731 = vadd.f32 %v2682, 1.0
        %v2732 = vadd.f32 %v2684, 1.0
        %v2733 = vadd.f32 %v2686, 1.0
        %v2734 = vadd.f32 %v2688, 1.0
        %v2735 = vadd.f32 %v2690, 1.0
        %v2736 = vadd.f32 %v2692, 1.0
        %v2737 = vadd.f32 %v2694, 1.0
        %v2738 = vadd.f32 %v2696, 1.0
        %v2739 = vadd.f32 %v2698, 1.0
        %v2740 = vadd.f32 %v2700, 1.0
        %v2741 = vadd.f32 %v2702, 1.0
        %v2742 = vadd.f32 %v2704, 1.0
        %v2743 = vadd.f32 %v2706, 1.0
        %v2744 = vadd.f32 %v2708, 1.0
        %v2745 = vadd.f32 %v2710, 1.0
        %v2746 = vadd.f32 %v2712, 1.0
        %v2747 = vadd.f32 %v2714, 1.0
        %v2748 = vadd.f32 %v2716, 1.0
        %v2749 = vrcp.pop %v2717
        %v2750 = vrcp.pop %v2718
        %v2751 = vrcp.pop %v2719
        %v2752 = vrcp.pop %v2720
        %v2753 = vrcp.pop %v2721
        %v2754 = vrcp.pop %v2722
        %v2755 = vrcp.pop %v2723
        %v2756 = vrcp.pop %v2724
        %v2757 = vrcp.pop %v2725
        %v2758 = vrcp.pop %v2726
        %v2759 = vrcp.pop %v2727
        %v2760 = vrcp.pop %v2728
        %v2761 = vrcp.pop %v2729
        %v2762 = vrcp.pop %v2730
        %v2763 = vrcp.pop %v2731
        %v2764 = vrcp.pop %v2732
        %v2765 = vrcp.pop %v2733
        %v2766 = vrcp.pop %v2734
        %v2767 = vrcp.pop %v2735
        %v2768 = vrcp.pop %v2736
        %v2769 = vrcp.pop %v2737
        %v2770 = vrcp.pop %v2738
        %v2771 = vrcp.pop %v2739
        %v2772 = vrcp.pop %v2740
        %v2773 = vrcp.pop %v2741
        %v2774 = vrcp.pop %v2742
        %v2775 = vrcp.pop %v2743
        %v2776 = vrcp.pop %v2744
        %v2777 = vrcp.pop %v2745
        %v2778 = vrcp.pop %v2746
        %v2779 = vrcp.pop %v2747
        %v2780 = vrcp.pop %v2748
        %2781 = vst [vmem:[%s449] sm:$0xff] %v2749
        %2782 = vst [vmem:[%s449 + $0x8] sm:$0xff] %v2750
        %2783 = vst [vmem:[%s449 + $0x10] sm:$0xff] %v2751
        %2784 = vst [vmem:[%s449 + $0x18] sm:$0xff] %v2752
        %2785 = vst [vmem:[%s449 + $0x20] sm:$0xff] %v2753
        %2786 = vst [vmem:[%s449 + $0x28] sm:$0xff] %v2754
        %2787 = vst [vmem:[%s449 + $0x30] sm:$0xff] %v2755
        %2788 = vst [vmem:[%s449 + $0x38] sm:$0xff] %v2756
        %2789 = vst [vmem:[%s449 + $0x40] sm:$0xff] %v2757
        %2790 = vst [vmem:[%s449 + $0x48] sm:$0xff] %v2758
        %2791 = vst [vmem:[%s449 + $0x50] sm:$0xff] %v2759
        %2792 = vst [vmem:[%s449 + $0x58] sm:$0xff] %v2760
        %2793 = vst [vmem:[%s449 + $0x60] sm:$0xff] %v2761
        %2794 = vst [vmem:[%s449 + $0x68] sm:$0xff] %v2762
        %2795 = vst [vmem:[%s449 + $0x70] sm:$0xff] %v2763
        %2796 = vst [vmem:[%s449 + $0x78] sm:$0xff] %v2764
        %2797 = vst [vmem:[%s449 + $0x80] sm:$0xff] %v2765
        %2798 = vst [vmem:[%s449 + $0x88] sm:$0xff] %v2766
        %2799 = vst [vmem:[%s449 + $0x90] sm:$0xff] %v2767
        %2800 = vst [vmem:[%s449 + $0x98] sm:$0xff] %v2768
        %2801 = vst [vmem:[%s449 + $0xa0] sm:$0xff] %v2769
        %2802 = vst [vmem:[%s449 + $0xa8] sm:$0xff] %v2770
        %2803 = vst [vmem:[%s449 + $0xb0] sm:$0xff] %v2771
        %2804 = vst [vmem:[%s449 + $0xb8] sm:$0xff] %v2772
        %2805 = vst [vmem:[%s449 + $0xc0] sm:$0xff] %v2773
        %2806 = vst [vmem:[%s449 + $0xc8] sm:$0xff] %v2774
        %2807 = vst [vmem:[%s449 + $0xd0] sm:$0xff] %v2775
        %2808 = vst [vmem:[%s449 + $0xd8] sm:$0xff] %v2776
        %2809 = vst [vmem:[%s449 + $0xe0] sm:$0xff] %v2777
        %2810 = vst [vmem:[%s449 + $0xe8] sm:$0xff] %v2778
        %2811 = vst [vmem:[%s449 + $0xf0] sm:$0xff] %v2779
        %2812 = vst [vmem:[%s449 + $0xf8] sm:$0xff] %v2780
        %s2813 = sand.u32 %s314, 1
        %s2814 = scalar_lea.sflag [#allocation4], %s2813
        %s2815 = sand.u32 %s314, 1
        %s2816 = smul.addr %s2815, 256
        %s2817 = scalar_lea.vmem [#allocation5], %s2816
        // Predicated region
        $region77: #{tpu_custom_call.1} parent=71 // pred_check
          %p2818 = pneg %p324
        $region78: #{tpu_custom_call.1} parent=71 // pred_check_branch
          %2820 = sbr.rel (%p2818) target = $region80
        $region79: #{tpu_custom_call.1} parent=71 // pred_region
          %s2821 = smul.u32 32, %s28
          %s2823 = ssub.s32 4096, 4096
          %2824 = vsyncadd %s2814, %s2823
          %s2825 = smul.addr %s2821, 128
          %s2826 = scalar_lea.hbm %s13, %s2825
          %s2827 = sshll.u32 %s2817, 4
          %s2828 = int_to_ptr.vmem [resolvable:$true] %s2827
          %2833 = dma.vmem_to_hbm [thread:$0]  %s2828, 4096, %s2826, %s2814, 128, 128, 8
        $region80: #{tpu_custom_call.1} parent=71 // pred_fallthru
          _
      $region72: #{tpu_custom_call.1} parent=5 // pred_fallthru
        _
      %p2834 = scmp.le.s32.totalorder 2, %s23
      // Predicated region
      $region81: #{tpu_custom_call.1} parent=5 // pred_check
        %p2835 = pneg %p2834
      $region82: #{tpu_custom_call.1} parent=5 // pred_check_branch
        %2837 = sbr.rel (%p2835) target = $region84
      $region83: #{tpu_custom_call.1} parent=5 // pred_region
        %s2838 = ssub.s32 %s23, 2
        // Predicated region
        $region85: #{tpu_custom_call.1} parent=83 // pred_check
          %p2839 = pneg %p330
        $region86: #{tpu_custom_call.1} parent=83 // pred_check_branch
          %2841 = sbr.rel (%p2839) target = $region88
        $region87: #{tpu_custom_call.1} parent=83 // pred_region
          %s2842 = sand.u32 %s315, 1
          %s2843 = scalar_lea.sflag [#allocation4], %s2842
          %s2844 = sand.u32 %s315, 1
          %s2845 = smul.addr %s2844, 256
          %s2846 = scalar_lea.vmem [#allocation5], %s2845
          %2847 = dma.done %s2843, 4096
        $region88: #{tpu_custom_call.1} parent=83 // pred_fallthru
          _
      $region84: #{tpu_custom_call.1} parent=5 // pred_fallthru
        _
    $region6: #{tpu_custom_call.1} parent=1 // loop_footer
      %s27 = sadd.s32 1, %s23
    $region7: #{tpu_custom_call.1} parent=1 // loop_footer_branch
      %22 = sbr.rel target = $region3
    $region8: #{tpu_custom_call.1} parent=1 // loop_exit
      _
    %2848 = vsyncpa [#allocation3], 1
    %s2849 = scalar_lea.sflag [#allocation3], 1
    %2850 = vsyncpa %s2849, 1
    %2851 = vsyncpa [#allocation4], 1
    %s2852 = scalar_lea.sflag [#allocation4], 1
    %2853 = vsyncpa %s2852, 1

</llo_original>
